<compile_context>
chip_gen: v6e
topology: v6e:2x2x1
jax: 0.10.0
libtpu: 0.0.40
codegen_flags: <defaults>
</compile_context>

<pallas_src>
import functools
import math

import jax
import jax.numpy as jnp
from jax.experimental import pallas as pl
from jax.experimental.pallas import tpu as pltpu


# ----------------------------- linear kernels -----------------------------
def _linear_kernel_single_k(x_ref, w_ref, b_ref, o_ref):
    # Whole K reduction in one tile: no scratch accumulator needed.
    acc = jnp.dot(
        x_ref[...].astype(jnp.bfloat16),
        w_ref[...].astype(jnp.bfloat16),
        preferred_element_type=jnp.float32,
    )
    o_ref[...] = (acc + b_ref[...].astype(jnp.float32)).astype(o_ref.dtype)


def _linear_kernel_multi_k(x_ref, w_ref, b_ref, o_ref, acc_ref):
    @pl.when(pl.program_id(2) == 0)
    def _():
        acc_ref[...] = jnp.zeros_like(acc_ref)

    # bf16 MXU operands, f32 accumulation (accuracy impact negligible here).
    acc_ref[...] += jnp.dot(
        x_ref[...].astype(jnp.bfloat16),
        w_ref[...].astype(jnp.bfloat16),
        preferred_element_type=jnp.float32,
    )

    @pl.when(pl.program_id(2) == pl.num_programs(2) - 1)
    def _():
        o_ref[...] = (acc_ref[...] + b_ref[...].astype(jnp.float32)).astype(o_ref.dtype)


def _largest_divisor_tile(size, target, align):
    """Largest multiple of `align` dividing `size` and <= target, else `size`."""
    if size <= target:
        return size
    t = (target // align) * align
    while t >= align:
        if size % t == 0:
            return t
        t -= align
    return size


def pallas_linear(x2d, w, b, *, tm_target=256, tn_target=512, tk_target=512):
    """x2d: (M, K), w: (K, N), b: (1, N) -> (M, N).  Tiled + pipelined.

    Tile targets (tm=256, tn=512, tk=512 in f32) keep the working set well
    inside the default scoped-VMEM limit even on v7x (64 MiB physical).
    """
    M, K = x2d.shape
    N = w.shape[1]
    tm = _largest_divisor_tile(M, tm_target, 8)
    tn = _largest_divisor_tile(N, tn_target, 128)
    tk = _largest_divisor_tile(K, tk_target, 128)
    kt = K // tk

    if kt == 1:
        # Single K tile: skip the scratch accumulator entirely.
        return pl.pallas_call(
            _linear_kernel_single_k,
            out_shape=jax.ShapeDtypeStruct((M, N), x2d.dtype),
            grid=(M // tm, N // tn),
            in_specs=[
                pl.BlockSpec((tm, K), lambda i, j: (i, 0)),
                pl.BlockSpec((K, tn), lambda i, j: (0, j)),
                pl.BlockSpec((1, tn), lambda i, j: (0, j)),
            ],
            out_specs=pl.BlockSpec((tm, tn), lambda i, j: (i, j)),
            compiler_params=pltpu.CompilerParams(
                dimension_semantics=("parallel", "parallel")
            ),
        )(x2d, w, b)

    return pl.pallas_call(
        _linear_kernel_multi_k,
        out_shape=jax.ShapeDtypeStruct((M, N), x2d.dtype),
        grid=(M // tm, N // tn, kt),
        in_specs=[
            pl.BlockSpec((tm, tk), lambda i, j, k: (i, k)),
            pl.BlockSpec((tk, tn), lambda i, j, k: (k, j)),
            pl.BlockSpec((1, tn), lambda i, j, k: (0, j)),
        ],
        out_specs=pl.BlockSpec((tm, tn), lambda i, j, k: (i, j)),
        scratch_shapes=[pltpu.VMEM((tm, tn), jnp.float32)],
        compiler_params=pltpu.CompilerParams(
            dimension_semantics=("parallel", "parallel", "arbitrary")
        ),
    )(x2d, w, b)


# -------------------- fused rope + attention kernel -----------------------
def _rope_attn_kernel(qkv_ref, cos_ref, sin_ref, o_ref, *, heads, head_dim, scale):
    """One batch per grid step; all heads processed here.

    qkv_ref: (n, 3*inner)  fused q|k|v for this batch
    cos_ref: (n, head_dim) full-width cos table  [cos, cos]
    sin_ref: (n, head_dim) sign-folded sin table [-sin, sin]
    o_ref:   (n, inner)    lane-dense merged-heads output
    """
    inner = heads * head_dim
    half = head_dim // 2
    cos = cos_ref[...].astype(jnp.float32)
    sin = sin_ref[...].astype(jnp.float32)

    def rot_half(t):
        # rotate-half: [t1, t2] -> [t2, t1]
        if head_dim % 128 == 0:
            # lane-aligned: XLU rotation, no VALU / relayout cost
            return pltpu.roll(t, shift=half, axis=1)
        # fallback for non-lane-aligned head_dim (e.g. 64)
        return jnp.concatenate([t[:, half:], t[:, :half]], axis=-1)

    for h in range(heads):
        off = h * head_dim
        q = qkv_ref[:, off:off + head_dim].astype(jnp.float32)
        k = qkv_ref[:, inner + off:inner + off + head_dim].astype(jnp.float32)
        v = qkv_ref[:, 2 * inner + off:2 * inner + off + head_dim]

        # RoPE: t*[cos,cos] + rot_half(t)*[-sin,sin]
        # Fold the softmax scale into q (O(n*d) instead of O(n^2) on scores).
        qr = (q * cos + rot_half(q) * sin) * scale
        kr = k * cos + rot_half(k) * sin

        # scores (n, n): bf16 MXU operands, f32 accumulation
        s = jax.lax.dot_general(
            qr.astype(jnp.bfloat16), kr.astype(jnp.bfloat16),
            (((1,), (1,)), ((), ())),
            preferred_element_type=jnp.float32,
        )

        # softmax in f32 (max-subtracted); normalize after the P@V matmul
        m = jnp.max(s, axis=-1, keepdims=True)
        p = jnp.exp(s - m)
        l = jnp.sum(p, axis=-1, keepdims=True)
        o = jax.lax.dot_general(
            p.astype(jnp.bfloat16), v.astype(jnp.bfloat16),
            (((1,), (0,)), ((), ())),
            preferred_element_type=jnp.float32,
        )
        o = o * pl.reciprocal(l, approx=True)

        # lane-dense merged-heads write
        o_ref[:, off:off + head_dim] = o.astype(o_ref.dtype)


def pallas_rope_attention(qkv2d, cos_f, sin_s, *, heads, head_dim, scale, seq_len):
    """qkv2d: (b*n, 3*inner) -> (b*n, inner)  (heads already merged)."""
    bn, three_inner = qkv2d.shape
    inner = heads * head_dim
    n = seq_len
    b = bn // n
    kern = functools.partial(
        _rope_attn_kernel, heads=heads, head_dim=head_dim, scale=scale
    )
    # TODO(synk): for seq lengths >~1-2K, switch to a flash-style q-tile x
    # kv-loop (online softmax) instead of materializing the full (n, n) scores.
    return pl.pallas_call(
        kern,
        out_shape=jax.ShapeDtypeStruct((bn, inner), qkv2d.dtype),
        grid=(b,),
        in_specs=[
            pl.BlockSpec((n, three_inner), lambda i: (i, 0)),
            pl.BlockSpec((n, head_dim), lambda i: (0, 0)),
            pl.BlockSpec((n, head_dim), lambda i: (0, 0)),
        ],
        out_specs=pl.BlockSpec((n, inner), lambda i: (i, 0)),
        compiler_params=pltpu.CompilerParams(dimension_semantics=("parallel",)),
    )(qkv2d, cos_f, sin_s)


# ----------------------------- full forward -------------------------------
def attention_forward(x, params, *, heads, scale=None, base=10000.0):
    b, n, dim = x.shape
    head_dim = dim // heads
    half = head_dim // 2

    # to_qkv (fused), kept in (b*n, 3*inner) layout — the attention kernel
    # slices heads/chunks itself, so no split / transpose HBM round trips.
    qkv = pallas_linear(x.reshape(b * n, dim), params["w_qkv"], params["b_qkv"])

    # RotaryEmbedding(dim) cache; unsloth fast_rope uses only the first
    # head_dim//2 columns of each cached row.  Build full-width cos and
    # sign-folded sin tables so RoPE is t*cos_f + rot_half(t)*sin_s.
    inv_freq = 1.0 / (base ** (jnp.arange(0, dim, 2, dtype=jnp.float32) / dim))
    t = jnp.arange(n, dtype=jnp.float32)
    freqs = jnp.outer(t, inv_freq)[:, :half]            # (n, head_dim // 2)
    cos = jnp.cos(freqs)
    sin = jnp.sin(freqs)
    cos_f = jnp.concatenate([cos, cos], axis=-1)        # (n, head_dim)
    sin_s = jnp.concatenate([-sin, sin], axis=-1)       # (n, head_dim)

    if scale is None:
        scale = 1.0 / math.sqrt(head_dim)

    # TODO(synk): dropout_p > 0 (training-mode SDPA dropout) not implemented;
    # this kernel assumes inference (dropout = 0.0).
    out = pallas_rope_attention(
        qkv, cos_f, sin_s, heads=heads, head_dim=head_dim, scale=scale, seq_len=n
    )  # (b*n, inner), heads already merged lane-dense

    out = pallas_linear(out, params["w_out"], params["b_out"])
    return out.reshape(b, n, dim)


# --------------------------- pure-JAX reference ----------------------------
def attention_reference(x, params, *, heads, scale=None, base=10000.0):
    b, n, dim = x.shape
    head_dim = dim // heads
    inner = head_dim * heads
    qkv = x.reshape(b * n, dim) @ params["w_qkv"] + params["b_qkv"]
    qkv = qkv.reshape(b, n, 3 * inner)
    q, k, v = jnp.split(qkv, 3, axis=-1)
    r = lambda t: t.reshape(b, n, heads, head_dim).transpose(0, 2, 1, 3)
    q, k, v = r(q), r(k), r(v)
    inv_freq = 1.0 / (base ** (jnp.arange(0, dim, 2, dtype=jnp.float32) / dim))
    freqs = jnp.outer(jnp.arange(n, dtype=jnp.float32), inv_freq)
    cos = jnp.cos(freqs[:, : head_dim // 2])[None, None]
    sin = jnp.sin(freqs[:, : head_dim // 2])[None, None]

    def rope(t):
        t1, t2 = t[..., : head_dim // 2], t[..., head_dim // 2:]
        return jnp.concatenate([t1 * cos - t2 * sin, t2 * cos + t1 * sin], -1)

    q, k = rope(q), rope(k)
    if scale is None:
        scale = 1.0 / math.sqrt(head_dim)
    s = jnp.einsum("bhqd,bhkd->bhqk", q, k) * scale
    p = jax.nn.softmax(s, axis=-1)
    o = jnp.einsum("bhqk,bhkd->bhqd", p, v)
    o = o.transpose(0, 2, 1, 3).reshape(b * n, inner)
    o = o @ params["w_out"] + params["b_out"]
    return o.reshape(b, n, dim)


if __name__ == "__main__":
    # Module config: dim // heads must be in [64, 256].  head_dim=128 keeps the
    # RoPE rotate-half lane-aligned (pltpu.roll path) and all in-kernel head
    # slices 128-aligned.
    dim, heads = 256, 2
    b, n = 2, 8
    head_dim = dim // heads
    inner = head_dim * heads

    key = jax.random.PRNGKey(0)
    kx, kw1, kb1, kw2, kb2 = jax.random.split(key, 5)

    x = jax.random.normal(kx, (b, n, dim), dtype=jnp.float32)
    params = {
        # stored pre-transposed: (in_features, out_features)
        "w_qkv": 0.02 * jax.random.normal(kw1, (dim, 3 * inner), jnp.float32),
        "b_qkv": 0.02 * jax.random.normal(kb1, (1, 3 * inner), jnp.float32),
        "w_out": 0.02 * jax.random.normal(kw2, (inner, dim), jnp.float32),
        "b_out": 0.02 * jax.random.normal(kb2, (1, dim), jnp.float32),
    }

    fwd = jax.jit(functools.partial(attention_forward, heads=heads, scale=None))
    out = fwd(x, params)
    out = jax.block_until_ready(out)

    ref = attention_reference(x, params, heads=heads, scale=None)
    assert out.shape == (b, n, dim)
    assert jnp.allclose(out, ref, atol=2e-2, rtol=2e-2), "mismatch vs reference"

    print("KERNEL_OK")
</pallas_src>

<mosaic_0001>
module attributes {stable_mosaic.version = 11 : i64} {
  func.func @_linear_kernel_single_k(%arg0: i32, %arg1: i32, %arg2: memref<16x256xf32, #tpu.memory_space<vmem>>, %arg3: memref<256x256xf32, #tpu.memory_space<vmem>>, %arg4: memref<1x256xf32, #tpu.memory_space<vmem>>, %arg5: memref<16x256xf32, #tpu.memory_space<vmem>>) attributes {dimension_semantics = [#tpu.dimension_semantics<parallel>, #tpu.dimension_semantics<parallel>], iteration_bounds = array<i64: 1, 1>, scalar_prefetch = 0 : i64, scratch_operands = 0 : i64, tpu.core_type = #tpu.core_type<tc>, window_params = [{transform_indices = @transform_0, window_bounds = array<i64: 16, 256>}, {transform_indices = @transform_1, window_bounds = array<i64: 256, 256>}, {transform_indices = @transform_2, window_bounds = array<i64: 1, 256>}, {transform_indices = @transform_3, window_bounds = array<i64: 16, 256>}]} {
    %c0 = arith.constant 0 : index
    %c0_0 = arith.constant 0 : index
    %0 = vector.load %arg2[%c0, %c0_0] : memref<16x256xf32, #tpu.memory_space<vmem>>, vector<16x256xf32>
    %1 = arith.truncf %0 : vector<16x256xf32> to vector<16x256xbf16>
    %c0_1 = arith.constant 0 : index
    %c0_2 = arith.constant 0 : index
    %2 = vector.load %arg3[%c0_1, %c0_2] : memref<256x256xf32, #tpu.memory_space<vmem>>, vector<256x256xf32>
    %3 = arith.truncf %2 : vector<256x256xf32> to vector<256x256xbf16>
    %cst = arith.constant dense<0.000000e+00> : vector<16x256xf32>
    %4 = tpu.matmul %1, %3, %cst {dimension_numbers = #tpu.dot_dimension_numbers<[1], [0], [0], [1], [0, 0, 1, 1], [], []>} : vector<16x256xbf16>, vector<256x256xbf16>, vector<16x256xf32> -> vector<16x256xf32>
    %c0_3 = arith.constant 0 : index
    %c0_4 = arith.constant 0 : index
    %5 = vector.load %arg4[%c0_3, %c0_4] : memref<1x256xf32, #tpu.memory_space<vmem>>, vector<1x256xf32>
    %6 = vector.broadcast %5 : vector<1x256xf32> to vector<16x256xf32>
    %7 = arith.addf %4, %6 : vector<16x256xf32>
    %c0_5 = arith.constant 0 : index
    %c0_6 = arith.constant 0 : index
    %8 = vector.load %arg5[%c0_5, %c0_6] : memref<16x256xf32, #tpu.memory_space<vmem>>, vector<16x256xf32>
    tpu.vector_store %arg5[%c0_5, %c0_6], %7 {strides = array<i32>} : memref<16x256xf32, #tpu.memory_space<vmem>>, vector<16x256xf32>,
    return
  }
  func.func @transform_0(%arg0: i32, %arg1: i32) -> (i32, i32) {
    %c0_i32 = arith.constant 0 : i32
    %c0_i32_0 = arith.constant 0 : i32
    return %arg0, %c0_i32 : i32, i32
  }
  func.func @transform_1(%arg0: i32, %arg1: i32) -> (i32, i32) {
    %c0_i32 = arith.constant 0 : i32
    %c0_i32_0 = arith.constant 0 : i32
    return %c0_i32, %arg1 : i32, i32
  }
  func.func @transform_2(%arg0: i32, %arg1: i32) -> (i32, i32) {
    %c0_i32 = arith.constant 0 : i32
    %c0_i32_0 = arith.constant 0 : i32
    return %c0_i32, %arg1 : i32, i32
  }
  func.func @transform_3(%arg0: i32, %arg1: i32) -> (i32, i32) {
    %c0_i32 = arith.constant 0 : i32
    return %arg0, %arg1 : i32, i32
  }
}

module attributes {stable_mosaic.version = 11 : i64} {
  func.func @_rope_attn_kernel(%arg0: i32, %arg1: memref<8x768xf32, #tpu.memory_space<vmem>>, %arg2: memref<8x128xf32, #tpu.memory_space<vmem>>, %arg3: memref<8x128xf32, #tpu.memory_space<vmem>>, %arg4: memref<8x256xf32, #tpu.memory_space<vmem>>) attributes {dimension_semantics = [#tpu.dimension_semantics<parallel>], iteration_bounds = array<i64: 2>, scalar_prefetch = 0 : i64, scratch_operands = 0 : i64, tpu.core_type = #tpu.core_type<tc>, window_params = [{transform_indices = @transform_0, window_bounds = array<i64: 8, 768>}, {pipeline_mode = #tpu.pipeline_mode<synchronous>, transform_indices = @transform_1, window_bounds = array<i64: 8, 128>}, {pipeline_mode = #tpu.pipeline_mode<synchronous>, transform_indices = @transform_2, window_bounds = array<i64: 8, 128>}, {transform_indices = @transform_3, window_bounds = array<i64: 8, 256>}]} {
    %c0 = arith.constant 0 : index
    %c0_0 = arith.constant 0 : index
    %0 = vector.load %arg2[%c0, %c0_0] : memref<8x128xf32, #tpu.memory_space<vmem>>, vector<8x128xf32>
    %c0_1 = arith.constant 0 : index
    %c0_2 = arith.constant 0 : index
    %1 = vector.load %arg3[%c0_1, %c0_2] : memref<8x128xf32, #tpu.memory_space<vmem>>, vector<8x128xf32>
    %c0_3 = arith.constant 0 : index
    %c0_4 = arith.constant 0 : index
    %2 = vector.load %arg1[%c0_3, %c0_4] : memref<8x768xf32, #tpu.memory_space<vmem>>, vector<8x128xf32>
    %c0_5 = arith.constant 0 : index
    %c256 = arith.constant 256 : index
    %3 = vector.load %arg1[%c0_5, %c256] : memref<8x768xf32, #tpu.memory_space<vmem>>, vector<8x128xf32>
    %c0_6 = arith.constant 0 : index
    %c512 = arith.constant 512 : index
    %4 = vector.load %arg1[%c0_6, %c512] : memref<8x768xf32, #tpu.memory_space<vmem>>, vector<8x128xf32>
    %5 = arith.mulf %2, %0 : vector<8x128xf32>
    %c64_i32 = arith.constant 64 : i32
    %6 = tpu.dynamic_rotate %2 by %c64_i32 dim 1 : vector<8x128xf32>, i32 -> vector<8x128xf32>
    %7 = arith.mulf %6, %1 : vector<8x128xf32>
    %8 = arith.addf %5, %7 : vector<8x128xf32>
    %cst = arith.constant 0.0883883461 : f32
    %9 = vector.broadcast %cst : f32 to vector<8x128xf32>
    %10 = arith.mulf %8, %9 : vector<8x128xf32>
    %11 = arith.mulf %3, %0 : vector<8x128xf32>
    %c64_i32_7 = arith.constant 64 : i32
    %12 = tpu.dynamic_rotate %3 by %c64_i32_7 dim 1 : vector<8x128xf32>, i32 -> vector<8x128xf32>
    %13 = arith.mulf %12, %1 : vector<8x128xf32>
    %14 = arith.addf %11, %13 : vector<8x128xf32>
    %15 = arith.truncf %10 : vector<8x128xf32> to vector<8x128xbf16>
    %16 = arith.truncf %14 : vector<8x128xf32> to vector<8x128xbf16>
    %cst_8 = arith.constant dense<0.000000e+00> : vector<8x8xf32>
    %17 = tpu.matmul %15, %16, %cst_8 {dimension_numbers = #tpu.dot_dimension_numbers<[1], [1], [0], [0], [0, 0, 1, 0], [], []>} : vector<8x128xbf16>, vector<8x128xbf16>, vector<8x8xf32> -> vector<8x8xf32>
    %cst_9 = arith.constant dense<0xFF800000> : vector<8xf32>
    %18 = vector.multi_reduction <maximumf>, %17, %cst_9 [1] : vector<8x8xf32> to vector<8xf32>
    %19 = vector.shape_cast %18 : vector<8xf32> to vector<8x1xf32>
    %20 = vector.broadcast %19 : vector<8x1xf32> to vector<8x8xf32>
    %21 = arith.subf %17, %20 : vector<8x8xf32>
    %22 = math.exp %21 : vector<8x8xf32>
    %cst_10 = arith.constant dense<0.000000e+00> : vector<8xf32>
    %23 = vector.multi_reduction <add>, %22, %cst_10 [1] : vector<8x8xf32> to vector<8xf32>
    %24 = vector.shape_cast %23 : vector<8xf32> to vector<8x1xf32>
    %25 = arith.truncf %22 : vector<8x8xf32> to vector<8x8xbf16>
    %26 = arith.truncf %4 : vector<8x128xf32> to vector<8x128xbf16>
    %cst_11 = arith.constant dense<0.000000e+00> : vector<8x128xf32>
    %27 = tpu.matmul %25, %26, %cst_11 {dimension_numbers = #tpu.dot_dimension_numbers<[1], [0], [0], [1], [0, 0, 1, 1], [], []>} : vector<8x8xbf16>, vector<8x128xbf16>, vector<8x128xf32> -> vector<8x128xf32>
    %28 = tpu.reciprocal %24 {approx = true} : vector<8x1xf32> -> vector<8x1xf32>
    %29 = vector.broadcast %28 : vector<8x1xf32> to vector<8x128xf32>
    %30 = arith.mulf %27, %29 : vector<8x128xf32>
    %c0_12 = arith.constant 0 : index
    %c0_13 = arith.constant 0 : index
    %31 = vector.load %arg4[%c0_12, %c0_13] : memref<8x256xf32, #tpu.memory_space<vmem>>, vector<8x128xf32>
    tpu.vector_store %arg4[%c0_12, %c0_13], %30 {strides = array<i32>} : memref<8x256xf32, #tpu.memory_space<vmem>>, vector<8x128xf32>,
    %c0_14 = arith.constant 0 : index
    %c128 = arith.constant 128 : index
    %32 = vector.load %arg1[%c0_14, %c128] : memref<8x768xf32, #tpu.memory_space<vmem>>, vector<8x128xf32>
    %c0_15 = arith.constant 0 : index
    %c384 = arith.constant 384 : index
    %33 = vector.load %arg1[%c0_15, %c384] : memref<8x768xf32, #tpu.memory_space<vmem>>, vector<8x128xf32>
    %c0_16 = arith.constant 0 : index
    %c640 = arith.constant 640 : index
    %34 = vector.load %arg1[%c0_16, %c640] : memref<8x768xf32, #tpu.memory_space<vmem>>, vector<8x128xf32>
    %35 = arith.mulf %32, %0 : vector<8x128xf32>
    %c64_i32_17 = arith.constant 64 : i32
    %36 = tpu.dynamic_rotate %32 by %c64_i32_17 dim 1 : vector<8x128xf32>, i32 -> vector<8x128xf32>
    %37 = arith.mulf %36, %1 : vector<8x128xf32>
    %38 = arith.addf %35, %37 : vector<8x128xf32>
    %cst_18 = arith.constant 0.0883883461 : f32
    %39 = vector.broadcast %cst_18 : f32 to vector<8x128xf32>
    %40 = arith.mulf %38, %39 : vector<8x128xf32>
    %41 = arith.mulf %33, %0 : vector<8x128xf32>
    %c64_i32_19 = arith.constant 64 : i32
    %42 = tpu.dynamic_rotate %33 by %c64_i32_19 dim 1 : vector<8x128xf32>, i32 -> vector<8x128xf32>
    %43 = arith.mulf %42, %1 : vector<8x128xf32>
    %44 = arith.addf %41, %43 : vector<8x128xf32>
    %45 = arith.truncf %40 : vector<8x128xf32> to vector<8x128xbf16>
    %46 = arith.truncf %44 : vector<8x128xf32> to vector<8x128xbf16>
    %cst_20 = arith.constant dense<0.000000e+00> : vector<8x8xf32>
    %47 = tpu.matmul %45, %46, %cst_20 {dimension_numbers = #tpu.dot_dimension_numbers<[1], [1], [0], [0], [0, 0, 1, 0], [], []>} : vector<8x128xbf16>, vector<8x128xbf16>, vector<8x8xf32> -> vector<8x8xf32>
    %cst_21 = arith.constant dense<0xFF800000> : vector<8xf32>
    %48 = vector.multi_reduction <maximumf>, %47, %cst_21 [1] : vector<8x8xf32> to vector<8xf32>
    %49 = vector.shape_cast %48 : vector<8xf32> to vector<8x1xf32>
    %50 = vector.broadcast %49 : vector<8x1xf32> to vector<8x8xf32>
    %51 = arith.subf %47, %50 : vector<8x8xf32>
    %52 = math.exp %51 : vector<8x8xf32>
    %cst_22 = arith.constant dense<0.000000e+00> : vector<8xf32>
    %53 = vector.multi_reduction <add>, %52, %cst_22 [1] : vector<8x8xf32> to vector<8xf32>
    %54 = vector.shape_cast %53 : vector<8xf32> to vector<8x1xf32>
    %55 = arith.truncf %52 : vector<8x8xf32> to vector<8x8xbf16>
    %56 = arith.truncf %34 : vector<8x128xf32> to vector<8x128xbf16>
    %cst_23 = arith.constant dense<0.000000e+00> : vector<8x128xf32>
    %57 = tpu.matmul %55, %56, %cst_23 {dimension_numbers = #tpu.dot_dimension_numbers<[1], [0], [0], [1], [0, 0, 1, 1], [], []>} : vector<8x8xbf16>, vector<8x128xbf16>, vector<8x128xf32> -> vector<8x128xf32>
    %58 = tpu.reciprocal %54 {approx = true} : vector<8x1xf32> -> vector<8x1xf32>
    %59 = vector.broadcast %58 : vector<8x1xf32> to vector<8x128xf32>
    %60 = arith.mulf %57, %59 : vector<8x128xf32>
    %c0_24 = arith.constant 0 : index
    %c128_25 = arith.constant 128 : index
    %61 = vector.load %arg4[%c0_24, %c128_25] : memref<8x256xf32, #tpu.memory_space<vmem>>, vector<8x128xf32>
    tpu.vector_store %arg4[%c0_24, %c128_25], %60 {strides = array<i32>} : memref<8x256xf32, #tpu.memory_space<vmem>>, vector<8x128xf32>,
    return
  }
  func.func @transform_0(%arg0: i32) -> (i32, i32) {
    %c0_i32 = arith.constant 0 : i32
    %c0_i32_0 = arith.constant 0 : i32
    return %arg0, %c0_i32 : i32, i32
  }
  func.func @transform_1(%arg0: i32) -> (i32, i32) {
    %c0_i32 = arith.constant 0 : i32
    %c0_i32_0 = arith.constant 0 : i32
    %c0_i32_1 = arith.constant 0 : i32
    return %c0_i32, %c0_i32_0 : i32, i32
  }
  func.func @transform_2(%arg0: i32) -> (i32, i32) {
    %c0_i32 = arith.constant 0 : i32
    %c0_i32_0 = arith.constant 0 : i32
    %c0_i32_1 = arith.constant 0 : i32
    return %c0_i32, %c0_i32_0 : i32, i32
  }
  func.func @transform_3(%arg0: i32) -> (i32, i32) {
    %c0_i32 = arith.constant 0 : i32
    %c0_i32_0 = arith.constant 0 : i32
    return %arg0, %c0_i32 : i32, i32
  }
}

module attributes {stable_mosaic.version = 11 : i64} {
  func.func @_linear_kernel_single_k(%arg0: i32, %arg1: i32, %arg2: memref<16x256xf32, #tpu.memory_space<vmem>>, %arg3: memref<256x384xf32, #tpu.memory_space<vmem>>, %arg4: memref<1x384xf32, #tpu.memory_space<vmem>>, %arg5: memref<16x384xf32, #tpu.memory_space<vmem>>) attributes {dimension_semantics = [#tpu.dimension_semantics<parallel>, #tpu.dimension_semantics<parallel>], iteration_bounds = array<i64: 1, 2>, scalar_prefetch = 0 : i64, scratch_operands = 0 : i64, tpu.core_type = #tpu.core_type<tc>, window_params = [{transform_indices = @transform_0, window_bounds = array<i64: 16, 256>}, {transform_indices = @transform_1, window_bounds = array<i64: 256, 384>}, {transform_indices = @transform_2, window_bounds = array<i64: 1, 384>}, {transform_indices = @transform_3, window_bounds = array<i64: 16, 384>}]} {
    %c0 = arith.constant 0 : index
    %c0_0 = arith.constant 0 : index
    %0 = vector.load %arg2[%c0, %c0_0] : memref<16x256xf32, #tpu.memory_space<vmem>>, vector<16x256xf32>
    %1 = arith.truncf %0 : vector<16x256xf32> to vector<16x256xbf16>
    %c0_1 = arith.constant 0 : index
    %c0_2 = arith.constant 0 : index
    %2 = vector.load %arg3[%c0_1, %c0_2] : memref<256x384xf32, #tpu.memory_space<vmem>>, vector<256x384xf32>
    %3 = arith.truncf %2 : vector<256x384xf32> to vector<256x384xbf16>
    %cst = arith.constant dense<0.000000e+00> : vector<16x384xf32>
    %4 = tpu.matmul %1, %3, %cst {dimension_numbers = #tpu.dot_dimension_numbers<[1], [0], [0], [1], [0, 0, 1, 1], [], []>} : vector<16x256xbf16>, vector<256x384xbf16>, vector<16x384xf32> -> vector<16x384xf32>
    %c0_3 = arith.constant 0 : index
    %c0_4 = arith.constant 0 : index
    %5 = vector.load %arg4[%c0_3, %c0_4] : memref<1x384xf32, #tpu.memory_space<vmem>>, vector<1x384xf32>
    %6 = vector.broadcast %5 : vector<1x384xf32> to vector<16x384xf32>
    %7 = arith.addf %4, %6 : vector<16x384xf32>
    %c0_5 = arith.constant 0 : index
    %c0_6 = arith.constant 0 : index
    %8 = vector.load %arg5[%c0_5, %c0_6] : memref<16x384xf32, #tpu.memory_space<vmem>>, vector<16x384xf32>
    tpu.vector_store %arg5[%c0_5, %c0_6], %7 {strides = array<i32>} : memref<16x384xf32, #tpu.memory_space<vmem>>, vector<16x384xf32>,
    return
  }
  func.func @transform_0(%arg0: i32, %arg1: i32) -> (i32, i32) {
    %c0_i32 = arith.constant 0 : i32
    %c0_i32_0 = arith.constant 0 : i32
    return %arg0, %c0_i32 : i32, i32
  }
  func.func @transform_1(%arg0: i32, %arg1: i32) -> (i32, i32) {
    %c0_i32 = arith.constant 0 : i32
    %c0_i32_0 = arith.constant 0 : i32
    return %c0_i32, %arg1 : i32, i32
  }
  func.func @transform_2(%arg0: i32, %arg1: i32) -> (i32, i32) {
    %c0_i32 = arith.constant 0 : i32
    %c0_i32_0 = arith.constant 0 : i32
    return %c0_i32, %arg1 : i32, i32
  }
  func.func @transform_3(%arg0: i32, %arg1: i32) -> (i32, i32) {
    %c0_i32 = arith.constant 0 : i32
    return %arg0, %arg1 : i32, i32
  }
}

</mosaic_0001>

<llo_original>
// kernel: attention_forward.5
$region0: #{attention_forward.5}
  #allocation0 [shape = 'u32[]', space=smem, size = 0x4, offset = 0x4, fixed_abs, tag = 'smem constant byte address 0x4 - core index']
  #allocation1 [shape = 'u32[144,128]{1,0:T(1,128)}', space=vmem, size = 0x12000, scoped, tag = 'internal scratch']
  %s0 = inlined_call_operand.vmem [shape: f32[16,256], index: 0, kind: input, shape index: {}]
  %s1 = inlined_call_operand.vmem [shape: f32[256,256], index: 1, kind: input, shape index: {}]
  %s2 = inlined_call_operand.vmem [shape: f32[1,256], index: 2, kind: input, shape index: {}]
  %s3 = inlined_call_operand.hbm [shape: f32[16,256], index: 3, kind: output, shape index: {}]
  %s4 = sld [smem:[#allocation0]]
  $region22: #{attention_forward.5} parent=0
    _
  %s6 = ssub.s32 1, %s4
  %s7 = scalar_select 0, %s6, %s4
  $region1: #{attention_forward.5} parent=0
    #allocation2 [shape = 'u8[16384]{0}', space=vmem, size = 0x4000, scoped, tag = 'output window, operand 0, single buffered']
    #allocation3 [shape = 's32[1]{0}', space=sflag, size = 0x4, scoped, tag = 'scoped memory for attention_forward.5']
    %8 = vsyncpa [#allocation3], 0
    // Predicated region
    $region2: #{attention_forward.5} parent=1 // pred_check
      _
    $region3: #{attention_forward.5} parent=1 // pred_check_branch
      %10 = sbr.rel (0) target = $region5
    $region4: #{attention_forward.5} parent=1 // pred_region
      _
    $region5: #{attention_forward.5} parent=1 // pred_fallthru
      _
    // Predicated region
    $region6: #{attention_forward.5} parent=1 // pred_check
      _
    $region7: #{attention_forward.5} parent=1 // pred_check_branch
      %12 = sbr.rel (0) target = $region9
    $region8: #{attention_forward.5} parent=1 // pred_region
      _
    $region9: #{attention_forward.5} parent=1 // pred_fallthru
      _
    // Predicated region
    $region10: #{attention_forward.5} parent=1 // pred_check
      _
    $region11: #{attention_forward.5} parent=1 // pred_check_branch
      %14 = sbr.rel (0) target = $region13
    $region12: #{attention_forward.5} parent=1 // pred_region
      _
    $region13: #{attention_forward.5} parent=1 // pred_fallthru
      _
    %v15 = vld [vmem:[%s0] sm:$0xff]
    %v16 = vld [vmem:[%s0 + $0x8] sm:$0xff]
    %v17 = vld [vmem:[%s0 + $0x10] sm:$0xff]
    %v18 = vld [vmem:[%s0 + $0x18] sm:$0xff]
    %v19 = vpack.c.bf16 %v17, %v15
    %v20 = vpack.c.bf16 %v18, %v16
    %v21 = vld [vmem:[%s1] sm:$0xff]
    %v22 = vld [vmem:[%s1 + $0x8] sm:$0xff]
    %v23 = vld [vmem:[%s1 + $0x10] sm:$0xff]
    %v24 = vld [vmem:[%s1 + $0x18] sm:$0xff]
    %v25 = vld [vmem:[%s1 + $0x20] sm:$0xff]
    %v26 = vld [vmem:[%s1 + $0x28] sm:$0xff]
    %v27 = vld [vmem:[%s1 + $0x30] sm:$0xff]
    %v28 = vld [vmem:[%s1 + $0x38] sm:$0xff]
    %v29 = vld [vmem:[%s1 + $0x40] sm:$0xff]
    %v30 = vld [vmem:[%s1 + $0x48] sm:$0xff]
    %v31 = vld [vmem:[%s1 + $0x50] sm:$0xff]
    %v32 = vld [vmem:[%s1 + $0x58] sm:$0xff]
    %v33 = vld [vmem:[%s1 + $0x60] sm:$0xff]
    %v34 = vld [vmem:[%s1 + $0x68] sm:$0xff]
    %v35 = vld [vmem:[%s1 + $0x70] sm:$0xff]
    %v36 = vld [vmem:[%s1 + $0x78] sm:$0xff]
    %v37 = vld [vmem:[%s1 + $0x80] sm:$0xff]
    %v38 = vld [vmem:[%s1 + $0x88] sm:$0xff]
    %v39 = vld [vmem:[%s1 + $0x90] sm:$0xff]
    %v40 = vld [vmem:[%s1 + $0x98] sm:$0xff]
    %v41 = vld [vmem:[%s1 + $0xa0] sm:$0xff]
    %v42 = vld [vmem:[%s1 + $0xa8] sm:$0xff]
    %v43 = vld [vmem:[%s1 + $0xb0] sm:$0xff]
    %v44 = vld [vmem:[%s1 + $0xb8] sm:$0xff]
    %v45 = vld [vmem:[%s1 + $0xc0] sm:$0xff]
    %v46 = vld [vmem:[%s1 + $0xc8] sm:$0xff]
    %v47 = vld [vmem:[%s1 + $0xd0] sm:$0xff]
    %v48 = vld [vmem:[%s1 + $0xd8] sm:$0xff]
    %v49 = vld [vmem:[%s1 + $0xe0] sm:$0xff]
    %v50 = vld [vmem:[%s1 + $0xe8] sm:$0xff]
    %v51 = vld [vmem:[%s1 + $0xf0] sm:$0xff]
    %v52 = vld [vmem:[%s1 + $0xf8] sm:$0xff]
    %v53 = vld [vmem:[%s1 + $0x100] sm:$0xff]
    %v54 = vld [vmem:[%s1 + $0x108] sm:$0xff]
    %v55 = vld [vmem:[%s1 + $0x110] sm:$0xff]
    %v56 = vld [vmem:[%s1 + $0x118] sm:$0xff]
    %v57 = vld [vmem:[%s1 + $0x120] sm:$0xff]
    %v58 = vld [vmem:[%s1 + $0x128] sm:$0xff]
    %v59 = vld [vmem:[%s1 + $0x130] sm:$0xff]
    %v60 = vld [vmem:[%s1 + $0x138] sm:$0xff]
    %v61 = vld [vmem:[%s1 + $0x140] sm:$0xff]
    %v62 = vld [vmem:[%s1 + $0x148] sm:$0xff]
    %v63 = vld [vmem:[%s1 + $0x150] sm:$0xff]
    %v64 = vld [vmem:[%s1 + $0x158] sm:$0xff]
    %v65 = vld [vmem:[%s1 + $0x160] sm:$0xff]
    %v66 = vld [vmem:[%s1 + $0x168] sm:$0xff]
    %v67 = vld [vmem:[%s1 + $0x170] sm:$0xff]
    %v68 = vld [vmem:[%s1 + $0x178] sm:$0xff]
    %v69 = vld [vmem:[%s1 + $0x180] sm:$0xff]
    %v70 = vld [vmem:[%s1 + $0x188] sm:$0xff]
    %v71 = vld [vmem:[%s1 + $0x190] sm:$0xff]
    %v72 = vld [vmem:[%s1 + $0x198] sm:$0xff]
    %v73 = vld [vmem:[%s1 + $0x1a0] sm:$0xff]
    %v74 = vld [vmem:[%s1 + $0x1a8] sm:$0xff]
    %v75 = vld [vmem:[%s1 + $0x1b0] sm:$0xff]
    %v76 = vld [vmem:[%s1 + $0x1b8] sm:$0xff]
    %v77 = vld [vmem:[%s1 + $0x1c0] sm:$0xff]
    %v78 = vld [vmem:[%s1 + $0x1c8] sm:$0xff]
    %v79 = vld [vmem:[%s1 + $0x1d0] sm:$0xff]
    %v80 = vld [vmem:[%s1 + $0x1d8] sm:$0xff]
    %v81 = vld [vmem:[%s1 + $0x1e0] sm:$0xff]
    %v82 = vld [vmem:[%s1 + $0x1e8] sm:$0xff]
    %v83 = vld [vmem:[%s1 + $0x1f0] sm:$0xff]
    %v84 = vld [vmem:[%s1 + $0x1f8] sm:$0xff]
    %v85 = vpack.c.bf16 %v23, %v21
    %v86 = vpack.c.bf16 %v24, %v22
    %v87 = vpack.c.bf16 %v27, %v25
    %v88 = vpack.c.bf16 %v28, %v26
    %v89 = vpack.c.bf16 %v31, %v29
    %v90 = vpack.c.bf16 %v32, %v30
    %v91 = vpack.c.bf16 %v35, %v33
    %v92 = vpack.c.bf16 %v36, %v34
    %v93 = vpack.c.bf16 %v39, %v37
    %v94 = vpack.c.bf16 %v40, %v38
    %v95 = vpack.c.bf16 %v43, %v41
    %v96 = vpack.c.bf16 %v44, %v42
    %v97 = vpack.c.bf16 %v47, %v45
    %v98 = vpack.c.bf16 %v48, %v46
    %v99 = vpack.c.bf16 %v51, %v49
    %v100 = vpack.c.bf16 %v52, %v50
    %v101 = vpack.c.bf16 %v55, %v53
    %v102 = vpack.c.bf16 %v56, %v54
    %v103 = vpack.c.bf16 %v59, %v57
    %v104 = vpack.c.bf16 %v60, %v58
    %v105 = vpack.c.bf16 %v63, %v61
    %v106 = vpack.c.bf16 %v64, %v62
    %v107 = vpack.c.bf16 %v67, %v65
    %v108 = vpack.c.bf16 %v68, %v66
    %v109 = vpack.c.bf16 %v71, %v69
    %v110 = vpack.c.bf16 %v72, %v70
    %v111 = vpack.c.bf16 %v75, %v73
    %v112 = vpack.c.bf16 %v76, %v74
    %v113 = vpack.c.bf16 %v79, %v77
    %v114 = vpack.c.bf16 %v80, %v78
    %v115 = vpack.c.bf16 %v83, %v81
    %v116 = vpack.c.bf16 %v84, %v82
    %v117 = vld [vmem:[%s2] sm:$0x3]
    %v119 = vlaneseq
    %v120 = vshrl.u32 %v119, 7
    %v121 = vsub.s32 0, %v120
    %v122 = vrot.slane %v117, %v121
    %v123 = vlaneseq
    %v124 = vshrl.u32 %v123, 7
    %v125 = vsub.s32 1, %v124
    %v126 = vrot.slane %v117, %v125
    %129 = vmatprep.subr.bf16.mxu0 %v100
    %130 = vmatpush1.bf16.msra.mxu0 %v99
    %131 = vmatprep.subr.bf16.mxu0 %v98
    %132 = vmatpush1.bf16.msra.mxu0 %v97
    %133 = vmatprep.subr.bf16.mxu0 %v96
    %134 = vmatpush1.bf16.msra.mxu0 %v95
    %135 = vmatprep.subr.bf16.mxu0 %v94
    %136 = vmatpush1.bf16.msra.mxu0 %v93
    %137 = vmatprep.subr.bf16.mxu0 %v92
    %138 = vmatpush1.bf16.msra.mxu0 %v91
    %139 = vmatprep.subr.bf16.mxu0 %v90
    %140 = vmatpush1.bf16.msra.mxu0 %v89
    %141 = vmatprep.subr.bf16.mxu0 %v88
    %142 = vmatpush1.bf16.msra.mxu0 %v87
    %143 = vmatprep.subr.bf16.mxu0 %v86
    %144 = vmatpush1.bf16.msra.mxu0 %v85
    %145 = vmatprep.subr.bf16.mxu0 %v116
    %146 = vmatpush2.bf16.msra.mxu0 %v115
    %147 = vmatprep.subr.bf16.mxu0 %v114
    %148 = vmatpush2.bf16.msra.mxu0 %v113
    %149 = vmatprep.subr.bf16.mxu0 %v112
    %150 = vmatpush2.bf16.msra.mxu0 %v111
    %151 = vmatprep.subr.bf16.mxu0 %v110
    %152 = vmatpush2.bf16.msra.mxu0 %v109
    %153 = vmatprep.subr.bf16.mxu0 %v108
    %154 = vmatpush2.bf16.msra.mxu0 %v107
    %155 = vmatprep.subr.bf16.mxu0 %v106
    %156 = vmatpush2.bf16.msra.mxu0 %v105
    %157 = vmatprep.subr.bf16.mxu0 %v104
    %158 = vmatpush2.bf16.msra.mxu0 %v103
    %159 = vmatprep.subr.bf16.mxu0 %v102
    %160 = vmatpush2.bf16.msra.mxu0 %v101
    %161 = vmatprep.mubr.bf16.mxu0 %v20
    %162 = vmatmul.mubr.bf16.gmra.mxu0 %v19
    %v163 = vpop.f32.mrf.mxu0
    %v164 = vadd.f32 %v122, %v163
    %v165 = vpop.f32.mrf.mxu0
    %v166 = vadd.f32 %v126, %v165
    %v167 = vpop.f32.mrf.mxu0
    %v168 = vadd.f32 %v122, %v167
    %v169 = vpop.f32.mrf.mxu0
    %v170 = vadd.f32 %v126, %v169
    %171 = vdwg.mxu0
    %172 = vst [vmem:[#allocation2] sm:$0xff] %v164
    %173 = vst [vmem:[#allocation2 + $0x8] sm:$0xff] %v166
    %174 = vst [vmem:[#allocation2 + $0x10] sm:$0xff] %v168
    %175 = vst [vmem:[#allocation2 + $0x18] sm:$0xff] %v170
    // Predicated region
    $region14: #{attention_forward.5} parent=1 // pred_check
      _
    $region15: #{attention_forward.5} parent=1 // pred_check_branch
      %177 = sbr.rel (0) target = $region17
    $region16: #{attention_forward.5} parent=1 // pred_region
      %s179 = ssub.s32 512, 512
      %180 = vsyncadd [#allocation3], %s179
      %s181 = sshll.u32 [#allocation2], 4
      %s182 = int_to_ptr.vmem [resolvable:$true] %s181
      %187 = dma.vmem_to_hbm [thread:$0]  %s182, 512, %s3, [#allocation3], 256, 256, 16
    $region17: #{attention_forward.5} parent=1 // pred_fallthru
      _
    // Predicated region
    $region18: #{attention_forward.5} parent=1 // pred_check
      _
    $region19: #{attention_forward.5} parent=1 // pred_check_branch
      %189 = sbr.rel (0) target = $region21
    $region20: #{attention_forward.5} parent=1 // pred_region
      %190 = dma.done [#allocation3], 512
    $region21: #{attention_forward.5} parent=1 // pred_fallthru
      _
    %191 = vsyncpa [#allocation3], 1

// kernel: attention_forward.4
$region0: #{attention_forward.4}
  #allocation0 [shape = 'u32[]', space=smem, size = 0x4, offset = 0x4, fixed_abs, tag = 'smem constant byte address 0x4 - core index']
  #allocation1 [shape = 'u32[144,128]{1,0:T(1,128)}', space=vmem, size = 0x12000, scoped, tag = 'internal scratch']
  %s0 = inlined_call_operand.vmem [shape: f32[16,768], index: 0, kind: input, shape index: {}]
  %s1 = inlined_call_operand.vmem [shape: f32[8,128], index: 1, kind: input, shape index: {}]
  %s2 = inlined_call_operand.vmem [shape: f32[8,128], index: 2, kind: input, shape index: {}]
  %s3 = inlined_call_operand.vmem [shape: f32[16,256], index: 3, kind: output, shape index: {}]
  %s4 = sld [smem:[#allocation0]]
  $region45: #{attention_forward.4} parent=0
    _
  %s6 = ssub.s32 1, %s4
  %s7 = scalar_select 0, %s6, %s4
  loop: start=0, step=1, limit=4
  $region2: #{attention_forward.4} parent=0 // loop_pre_header
    _
  $region3: #{attention_forward.4} parent=0 // loop_header
    %s9 = sphi 0, %s13
    %p10 = scmp.ge.s32.totalorder %s9, 4
    %s19 = sphi 0, %s21
    %s22 = sphi 0, %s19
    %s23 = sphi 0, %s22
    %s39 = sphi 0, %s23
    %s43 = sphi 0, %s43
    %s45 = sphi 0, %s43
    %s46 = sphi 0, %s45
    %s60 = sphi 0, %s46
    %s64 = sphi 0, %s64
    %s66 = sphi 0, %s64
    %s67 = sphi 0, %s66
    %s81 = sphi 0, %s67
    %s87 = sphi 0, %s89
    %s90 = sphi 0, %s87
    %s91 = sphi 0, %s90
    %s107 = sphi 0, %s91
  $region4: #{attention_forward.4} parent=0 // loop_header_branch
    %12 = sbr.rel (%p10) target = $region8
  $region5: #{attention_forward.4} parent=0 // loop_body
    %s14 = ssub.s32 %s9, 1
    %s15 = ssub.s32 %s9, 2
    %s16 = sadd.s32 %s9, 1
    %s17 = ssub.s32 %s9, %s16
    %p18 = scmp.eq.s32.totalorder %s17, 0
    %s20 = sadd.s32 %s19, 1
    %s21 = scalar_select %p18, %s19, %s20
    %p24 = pneg %p18
    %p25 = scmp.eq.s32.totalorder %s9, 1
    %p26 = por %p24, %p25
    %p27 = scmp.ne.s32.totalorder %s19, %s22
    %p28 = scmp.eq.s32.totalorder %s9, 0
    %p29 = por %p27, %p28
    %p30 = scmp.ne.s32.totalorder %s19, %s22
    %p31 = scmp.eq.s32.totalorder %s14, 1
    %p32 = por %p30, %p31
    %p33 = scmp.ne.s32.totalorder %s22, %s23
    %p34 = scmp.eq.s32.totalorder %s14, 0
    %p35 = por %p33, %p34
    %p36 = scmp.ne.s32.totalorder %s22, %s23
    %p37 = scmp.eq.s32.totalorder %s15, 1
    %p38 = por %p36, %p37
    %p40 = scmp.ne.s32.totalorder %s23, %s39
    %p41 = scmp.eq.s32.totalorder %s15, 0
    %p42 = por %p40, %p41
    %s44 = sadd.s32 %s43, 1
    %p47 = scmp.eq.s32.totalorder %s9, 1
    %p48 = scmp.ne.s32.totalorder %s43, %s45
    %p49 = scmp.eq.s32.totalorder %s9, 0
    %p50 = por %p48, %p49
    %p51 = scmp.ne.s32.totalorder %s43, %s45
    %p52 = scmp.eq.s32.totalorder %s14, 1
    %p53 = por %p51, %p52
    %p54 = scmp.ne.s32.totalorder %s45, %s46
    %p55 = scmp.eq.s32.totalorder %s14, 0
    %p56 = por %p54, %p55
    %p57 = scmp.ne.s32.totalorder %s45, %s46
    %p58 = scmp.eq.s32.totalorder %s15, 1
    %p59 = por %p57, %p58
    %p61 = scmp.ne.s32.totalorder %s46, %s60
    %p62 = scmp.eq.s32.totalorder %s15, 0
    %p63 = por %p61, %p62
    %s65 = sadd.s32 %s64, 1
    %p68 = scmp.eq.s32.totalorder %s9, 1
    %p69 = scmp.ne.s32.totalorder %s64, %s66
    %p70 = scmp.eq.s32.totalorder %s9, 0
    %p71 = por %p69, %p70
    %p72 = scmp.ne.s32.totalorder %s64, %s66
    %p73 = scmp.eq.s32.totalorder %s14, 1
    %p74 = por %p72, %p73
    %p75 = scmp.ne.s32.totalorder %s66, %s67
    %p76 = scmp.eq.s32.totalorder %s14, 0
    %p77 = por %p75, %p76
    %p78 = scmp.ne.s32.totalorder %s66, %s67
    %p79 = scmp.eq.s32.totalorder %s15, 1
    %p80 = por %p78, %p79
    %p82 = scmp.ne.s32.totalorder %s67, %s81
    %p83 = scmp.eq.s32.totalorder %s15, 0
    %p84 = por %p82, %p83
    %s85 = ssub.s32 %s9, %s16
    %p86 = scmp.eq.s32.totalorder %s85, 0
    %s88 = sadd.s32 %s87, 1
    %s89 = scalar_select %p86, %s87, %s88
    %p92 = pneg %p86
    %p93 = scmp.eq.s32.totalorder %s9, 1
    %p94 = por %p92, %p93
    %p95 = scmp.ne.s32.totalorder %s87, %s90
    %p96 = scmp.eq.s32.totalorder %s9, 0
    %p97 = por %p95, %p96
    %p98 = scmp.ne.s32.totalorder %s87, %s90
    %p99 = scmp.eq.s32.totalorder %s14, 1
    %p100 = por %p98, %p99
    %p101 = scmp.ne.s32.totalorder %s90, %s91
    %p102 = scmp.eq.s32.totalorder %s14, 0
    %p103 = por %p101, %p102
    %p104 = scmp.ne.s32.totalorder %s90, %s91
    %p105 = scmp.eq.s32.totalorder %s15, 1
    %p106 = por %p104, %p105
    %p108 = scmp.ne.s32.totalorder %s91, %s107
    %p109 = scmp.eq.s32.totalorder %s15, 0
    %p110 = por %p108, %p109
    %p111 = scmp.le.s32.totalorder 1, %s9
    %p112 = scmp.lt.s32.totalorder %s9, 3
    %p113 = pnand %p111, %p112
    %p114 = pneg %p113
    // Predicated region
    $region9: #{attention_forward.4} parent=5 // pred_check
      _
    $region10: #{attention_forward.4} parent=5 // pred_check_branch
      %116 = sbr.rel (%p113) target = $region12
    $region11: #{attention_forward.4} parent=5 // pred_region
      %s117 = ssub.s32 %s9, 1
      // Predicated region
      $region13: #{attention_forward.4} parent=11 // pred_check
        %p118 = pneg %p56
      $region14: #{attention_forward.4} parent=11 // pred_check_branch
        %120 = sbr.rel (%p118) target = $region16
      $region15: #{attention_forward.4} parent=11 // pred_region
        _
      $region16: #{attention_forward.4} parent=11 // pred_fallthru
        _
      // Predicated region
      $region17: #{attention_forward.4} parent=11 // pred_check
        %p121 = pneg %p77
      $region18: #{attention_forward.4} parent=11 // pred_check_branch
        %123 = sbr.rel (%p121) target = $region20
      $region19: #{attention_forward.4} parent=11 // pred_region
        _
      $region20: #{attention_forward.4} parent=11 // pred_fallthru
        _
    $region12: #{attention_forward.4} parent=5 // pred_fallthru
      _
    %p124 = scmp.lt.s32.totalorder %s9, 2
    // Predicated region
    $region21: #{attention_forward.4} parent=5 // pred_check
      %p125 = pneg %p124
    $region22: #{attention_forward.4} parent=5 // pred_check_branch
      %127 = sbr.rel (%p125) target = $region24
    $region23: #{attention_forward.4} parent=5 // pred_region
      // Predicated region
      $region25: #{attention_forward.4} parent=23 // pred_check
        %p128 = pneg %p29
      $region26: #{attention_forward.4} parent=23 // pred_check_branch
        %130 = sbr.rel (%p128) target = $region28
      $region27: #{attention_forward.4} parent=23 // pred_region
        %p131 = scmp.lt.s32.totalorder %s9, 1
        %s132 = scalar_select %p131, %s9, 1
        %s133 = smul.addr %s132, 6
        %s134 = smul.addr %s133, 8
        %s135 = scalar_lea.vmem %s0, %s134
      $region28: #{attention_forward.4} parent=23 // pred_fallthru
        _
    $region24: #{attention_forward.4} parent=5 // pred_fallthru
      _
    %p136 = scmp.le.s32.totalorder 1, %s9
    %p137 = scmp.lt.s32.totalorder %s9, 3
    %p138 = pnand %p136, %p137
    %p139 = pneg %p138
    // Predicated region
    $region29: #{attention_forward.4} parent=5 // pred_check
      _
    $region30: #{attention_forward.4} parent=5 // pred_check_branch
      %141 = sbr.rel (%p138) target = $region32
    $region31: #{attention_forward.4} parent=5 // pred_region
      %s142 = ssub.s32 %s9, 1
      %p143 = scmp.lt.s32.totalorder %s14, 1
      %s144 = scalar_select %p143, %s14, 1
      %s145 = smul.addr %s144, 6
      %s146 = smul.addr %s145, 8
      %s147 = scalar_lea.vmem %s0, %s146
      %p148 = pneg %p35
      %p149 = pneg %p32
      %p150 = pneg %p56
      %p151 = pneg %p53
      %p152 = pneg %p77
      %p153 = pneg %p74
      %p154 = pneg %p103
      %p155 = pneg %p100
      %p156 = scmp.lt.s32.totalorder %s14, 1
      %s157 = scalar_select %p156, %s14, 1
      %s158 = smul.addr %s157, 2
      %s159 = smul.addr %s158, 8
      %s160 = scalar_lea.vmem %s3, %s159
      %p161 = scmp.lt.s32.totalorder %s14, 1
      %s162 = scalar_select %p161, %s14, 1
      %s163 = smul.addr %s162, 6
      %s164 = smul.addr %s163, 8
      %s165 = scalar_lea.vmem %s0, %s164
      %p166 = scmp.lt.s32.totalorder %s14, 1
      %s167 = scalar_select %p166, %s14, 1
      %s168 = smul.addr %s167, 2
      %s169 = smul.addr %s168, 8
      %s170 = scalar_lea.vmem %s3, %s169
      %v172 = vld [vmem:[%s1] sm:$0xff]
      %v173 = vld [vmem:[%s2] sm:$0xff]
      %v174 = vld [vmem:[%s165] sm:$0xff]
      %v175 = vld [vmem:[%s165 + $0x10] sm:$0xff]
      %v176 = vld [vmem:[%s165 + $0x20] sm:$0xff]
      %v177 = vmul.f32 %v174, %v172
      %178 = vrot.lane.b32.xlu0 %v174, 64
      %v179 = vpop.permute.xlu0 %178
      %v180 = vmul.f32 %v179, %v173
      %v181 = vadd.f32 %v177, %v180
      %v182 = vmul.f32 %v181, 0.088388346
      %v183 = vmul.f32 %v175, %v172
      %184 = vrot.lane.b32.xlu0 %v175, 64
      %v185 = vpop.permute.xlu0 %184
      %v186 = vmul.f32 %v185, %v173
      %v187 = vadd.f32 %v183, %v186
      %v188 = vpack.c.bf16 %v182, %v182
      %v189 = vpack.c.bf16 %v187, %v187
      %190 = vmatprep.subr.bf16.mxu0 0
      %191 = vmatpush1.bf16.xpose.msra.mxu0 0
      %192 = vmatprep.subr.bf16.mxu0 0
      %193 = vmatpush1.bf16.xpose.msra.mxu0 0
      %194 = vmatprep.subr.bf16.mxu0 0
      %195 = vmatpush1.bf16.xpose.msra.mxu0 0
      %196 = vmatprep.subr.bf16.mxu0 0
      %197 = vmatpush1.bf16.xpose.msra.mxu0 0
      %198 = vmatprep.subr.bf16.mxu0 0
      %199 = vmatpush1.bf16.xpose.msra.mxu0 0
      %200 = vmatprep.subr.bf16.mxu0 0
      %201 = vmatpush1.bf16.xpose.msra.mxu0 0
      %202 = vmatprep.subr.bf16.mxu0 0
      %203 = vmatpush1.bf16.xpose.msra.mxu0 0
      %204 = vmatprep.subr.bf16.mxu0 0
      %205 = vmatpush1.bf16.xpose.msra.mxu0 %v189
      %206 = vmatprep.subr.bf16.mxu0 0
      %207 = vmatpush2.bf16.xpose.msra.mxu0 0
      %208 = vmatprep.subr.bf16.mxu0 0
      %209 = vmatpush2.bf16.xpose.msra.mxu0 0
      %210 = vmatprep.subr.bf16.mxu0 0
      %211 = vmatpush2.bf16.xpose.msra.mxu0 0
      %212 = vmatprep.subr.bf16.mxu0 0
      %213 = vmatpush2.bf16.xpose.msra.mxu0 0
      %214 = vmatprep.subr.bf16.mxu0 0
      %215 = vmatpush2.bf16.xpose.msra.mxu0 0
      %216 = vmatprep.subr.bf16.mxu0 0
      %217 = vmatpush2.bf16.xpose.msra.mxu0 0
      %218 = vmatprep.subr.bf16.mxu0 0
      %219 = vmatpush2.bf16.xpose.msra.mxu0 0
      %220 = vmatprep.subr.bf16.mxu0 0
      %221 = vmatpush2.bf16.xpose.msra.mxu0 0
      %222 = vmatprep.mubr.bf16.mxu0 0
      %223 = vmatmul.mubr.bf16.gmra.mxu0 %v188
      %v224 = vpop.f32.mrf.mxu0
      %v225 = vadd.f32 0.0, %v224
      %v226 = vpop.f32.mrf.mxu0
      %v227 = vpop.f32.mrf.mxu0
      %v228 = vpop.f32.mrf.mxu0
      %229 = vdwg.mxu0
      %vm230 = vcmask 64512
      %v231 = vsel %vm230, %v225, -inf
      %232 = vmax.xlane.f32.xlu0 %v231
      %v233 = vpop.xlane.xlu0 %232
      %v234 = vsub.f32 %v225, %v233
      %v235 = vmul.f32 %v234, 1.442695
      %v236 = vpow.pop %v235
      %v237 = vsel %vm230, %v236, 0.0
      %238 = vadd.xlane.f32.xlu0 %v237
      %v239 = vpop.xlane.xlu0 %238
      %v240 = vpack.c.bf16 %v236, %v236
      %v241 = vpack.c.bf16 %v176, %v176
      %v243 = vsel %vm230, %v240, 0
      %vm245 = vcmask 1043456
      %v247 = vsel %vm245, %v241, 0
      %249 = vmatprep.subr.bf16.mxu0 0
      %250 = vmatpush1.bf16.msra.mxu0 0
      %251 = vmatprep.subr.bf16.mxu0 0
      %252 = vmatpush1.bf16.msra.mxu0 0
      %253 = vmatprep.subr.bf16.mxu0 0
      %254 = vmatpush1.bf16.msra.mxu0 0
      %255 = vmatprep.subr.bf16.mxu0 0
      %256 = vmatpush1.bf16.msra.mxu0 0
      %257 = vmatprep.subr.bf16.mxu0 0
      %258 = vmatpush1.bf16.msra.mxu0 0
      %259 = vmatprep.subr.bf16.mxu0 0
      %260 = vmatpush1.bf16.msra.mxu0 0
      %261 = vmatprep.subr.bf16.mxu0 0
      %262 = vmatpush1.bf16.msra.mxu0 0
      %263 = vmatprep.subr.bf16.mxu0 0
      %264 = vmatpush1.bf16.msra.mxu0 %v247
      %265 = vmatprep.subr.bf16.mxu0 0
      %266 = vmatpush2.bf16.msra.mxu0 0
      %267 = vmatprep.subr.bf16.mxu0 0
      %268 = vmatpush2.bf16.msra.mxu0 0
      %269 = vmatprep.subr.bf16.mxu0 0
      %270 = vmatpush2.bf16.msra.mxu0 0
      %271 = vmatprep.subr.bf16.mxu0 0
      %272 = vmatpush2.bf16.msra.mxu0 0
      %273 = vmatprep.subr.bf16.mxu0 0
      %274 = vmatpush2.bf16.msra.mxu0 0
      %275 = vmatprep.subr.bf16.mxu0 0
      %276 = vmatpush2.bf16.msra.mxu0 0
      %277 = vmatprep.subr.bf16.mxu0 0
      %278 = vmatpush2.bf16.msra.mxu0 0
      %279 = vmatprep.subr.bf16.mxu0 0
      %280 = vmatpush2.bf16.msra.mxu0 0
      %281 = vmatprep.mubr.bf16.mxu0 0
      %282 = vmatmul.mubr.bf16.gmra.mxu0 %v243
      %v283 = vpop.f32.mrf.mxu0
      %v284 = vadd.f32 0.0, %v283
      %v285 = vpop.f32.mrf.mxu0
      %v286 = vpop.f32.mrf.mxu0
      %v287 = vpop.f32.mrf.mxu0
      %288 = vdwg.mxu0
      %v289 = vrcp.pop %v239
      %v290 = vmul.f32 %v284, %v289
      %291 = vst [vmem:[%s170] sm:$0xff] %v290
      %v292 = vld [vmem:[%s165 + $0x8] sm:$0xff]
      %v293 = vld [vmem:[%s165 + $0x18] sm:$0xff]
      %v294 = vld [vmem:[%s165 + $0x28] sm:$0xff]
      %v295 = vmul.f32 %v292, %v172
      %296 = vrot.lane.b32.xlu0 %v292, 64
      %v297 = vpop.permute.xlu0 %296
      %v298 = vmul.f32 %v297, %v173
      %v299 = vadd.f32 %v295, %v298
      %v300 = vmul.f32 %v299, 0.088388346
      %v301 = vmul.f32 %v293, %v172
      %302 = vrot.lane.b32.xlu0 %v293, 64
      %v303 = vpop.permute.xlu0 %302
      %v304 = vmul.f32 %v303, %v173
      %v305 = vadd.f32 %v301, %v304
      %v306 = vpack.c.bf16 %v300, %v300
      %v307 = vpack.c.bf16 %v305, %v305
      %308 = vmatprep.subr.bf16.mxu0 0
      %309 = vmatpush1.bf16.xpose.msra.mxu0 0
      %310 = vmatprep.subr.bf16.mxu0 0
      %311 = vmatpush1.bf16.xpose.msra.mxu0 0
      %312 = vmatprep.subr.bf16.mxu0 0
      %313 = vmatpush1.bf16.xpose.msra.mxu0 0
      %314 = vmatprep.subr.bf16.mxu0 0
      %315 = vmatpush1.bf16.xpose.msra.mxu0 0
      %316 = vmatprep.subr.bf16.mxu0 0
      %317 = vmatpush1.bf16.xpose.msra.mxu0 0
      %318 = vmatprep.subr.bf16.mxu0 0
      %319 = vmatpush1.bf16.xpose.msra.mxu0 0
      %320 = vmatprep.subr.bf16.mxu0 0
      %321 = vmatpush1.bf16.xpose.msra.mxu0 0
      %322 = vmatprep.subr.bf16.mxu0 0
      %323 = vmatpush1.bf16.xpose.msra.mxu0 %v307
      %324 = vmatprep.subr.bf16.mxu0 0
      %325 = vmatpush2.bf16.xpose.msra.mxu0 0
      %326 = vmatprep.subr.bf16.mxu0 0
      %327 = vmatpush2.bf16.xpose.msra.mxu0 0
      %328 = vmatprep.subr.bf16.mxu0 0
      %329 = vmatpush2.bf16.xpose.msra.mxu0 0
      %330 = vmatprep.subr.bf16.mxu0 0
      %331 = vmatpush2.bf16.xpose.msra.mxu0 0
      %332 = vmatprep.subr.bf16.mxu0 0
      %333 = vmatpush2.bf16.xpose.msra.mxu0 0
      %334 = vmatprep.subr.bf16.mxu0 0
      %335 = vmatpush2.bf16.xpose.msra.mxu0 0
      %336 = vmatprep.subr.bf16.mxu0 0
      %337 = vmatpush2.bf16.xpose.msra.mxu0 0
      %338 = vmatprep.subr.bf16.mxu0 0
      %339 = vmatpush2.bf16.xpose.msra.mxu0 0
      %340 = vmatprep.mubr.bf16.mxu0 0
      %341 = vmatmul.mubr.bf16.gmra.mxu0 %v306
      %v342 = vpop.f32.mrf.mxu0
      %v343 = vadd.f32 0.0, %v342
      %v344 = vpop.f32.mrf.mxu0
      %v345 = vpop.f32.mrf.mxu0
      %v346 = vpop.f32.mrf.mxu0
      %347 = vdwg.mxu0
      %v348 = vsel %vm230, %v343, -inf
      %349 = vmax.xlane.f32.xlu0 %v348
      %v350 = vpop.xlane.xlu0 %349
      %v351 = vsub.f32 %v343, %v350
      %v352 = vmul.f32 %v351, 1.442695
      %v353 = vpow.pop %v352
      %v354 = vsel %vm230, %v353, 0.0
      %355 = vadd.xlane.f32.xlu0 %v354
      %v356 = vpop.xlane.xlu0 %355
      %v357 = vpack.c.bf16 %v353, %v353
      %v358 = vpack.c.bf16 %v294, %v294
      %v360 = vsel %vm230, %v357, 0
      %v363 = vsel %vm245, %v358, 0
      %365 = vmatprep.subr.bf16.mxu0 0
      %366 = vmatpush1.bf16.msra.mxu0 0
      %367 = vmatprep.subr.bf16.mxu0 0
      %368 = vmatpush1.bf16.msra.mxu0 0
      %369 = vmatprep.subr.bf16.mxu0 0
      %370 = vmatpush1.bf16.msra.mxu0 0
      %371 = vmatprep.subr.bf16.mxu0 0
      %372 = vmatpush1.bf16.msra.mxu0 0
      %373 = vmatprep.subr.bf16.mxu0 0
      %374 = vmatpush1.bf16.msra.mxu0 0
      %375 = vmatprep.subr.bf16.mxu0 0
      %376 = vmatpush1.bf16.msra.mxu0 0
      %377 = vmatprep.subr.bf16.mxu0 0
      %378 = vmatpush1.bf16.msra.mxu0 0
      %379 = vmatprep.subr.bf16.mxu0 0
      %380 = vmatpush1.bf16.msra.mxu0 %v363
      %381 = vmatprep.subr.bf16.mxu0 0
      %382 = vmatpush2.bf16.msra.mxu0 0
      %383 = vmatprep.subr.bf16.mxu0 0
      %384 = vmatpush2.bf16.msra.mxu0 0
      %385 = vmatprep.subr.bf16.mxu0 0
      %386 = vmatpush2.bf16.msra.mxu0 0
      %387 = vmatprep.subr.bf16.mxu0 0
      %388 = vmatpush2.bf16.msra.mxu0 0
      %389 = vmatprep.subr.bf16.mxu0 0
      %390 = vmatpush2.bf16.msra.mxu0 0
      %391 = vmatprep.subr.bf16.mxu0 0
      %392 = vmatpush2.bf16.msra.mxu0 0
      %393 = vmatprep.subr.bf16.mxu0 0
      %394 = vmatpush2.bf16.msra.mxu0 0
      %395 = vmatprep.subr.bf16.mxu0 0
      %396 = vmatpush2.bf16.msra.mxu0 0
      %397 = vmatprep.mubr.bf16.mxu0 0
      %398 = vmatmul.mubr.bf16.gmra.mxu0 %v360
      %v399 = vpop.f32.mrf.mxu0
      %v400 = vadd.f32 0.0, %v399
      %v401 = vpop.f32.mrf.mxu0
      %v402 = vpop.f32.mrf.mxu0
      %v403 = vpop.f32.mrf.mxu0
      %404 = vdwg.mxu0
      %v405 = vrcp.pop %v356
      %v406 = vmul.f32 %v400, %v405
      %407 = vst [vmem:[%s170 + $0x8] sm:$0xff] %v406
      %p408 = scmp.lt.s32.totalorder %s14, 1
      %s409 = scalar_select %p408, %s14, 1
      %s410 = smul.addr %s409, 2
      %s411 = smul.addr %s410, 8
      %s412 = scalar_lea.vmem %s3, %s411
      // Predicated region
      $region33: #{attention_forward.4} parent=31 // pred_check
        %p413 = pneg %p100
      $region34: #{attention_forward.4} parent=31 // pred_check_branch
        %415 = sbr.rel (%p413) target = $region36
      $region35: #{attention_forward.4} parent=31 // pred_region
        _
      $region36: #{attention_forward.4} parent=31 // pred_fallthru
        _
    $region32: #{attention_forward.4} parent=5 // pred_fallthru
      _
    %p416 = scmp.le.s32.totalorder 2, %s9
    // Predicated region
    $region37: #{attention_forward.4} parent=5 // pred_check
      %p417 = pneg %p416
    $region38: #{attention_forward.4} parent=5 // pred_check_branch
      %419 = sbr.rel (%p417) target = $region40
    $region39: #{attention_forward.4} parent=5 // pred_region
      %s420 = ssub.s32 %s9, 2
      // Predicated region
      $region41: #{attention_forward.4} parent=39 // pred_check
        %p421 = pneg %p106
      $region42: #{attention_forward.4} parent=39 // pred_check_branch
        %423 = sbr.rel (%p421) target = $region44
      $region43: #{attention_forward.4} parent=39 // pred_region
        %p424 = scmp.lt.s32.totalorder %s15, 1
        %s425 = scalar_select %p424, %s15, 1
        %s426 = smul.addr %s425, 2
        %s427 = smul.addr %s426, 8
        %s428 = scalar_lea.vmem %s3, %s427
      $region44: #{attention_forward.4} parent=39 // pred_fallthru
        _
    $region40: #{attention_forward.4} parent=5 // pred_fallthru
      _
  $region6: #{attention_forward.4} parent=0 // loop_footer
    %s13 = sadd.s32 1, %s9
  $region7: #{attention_forward.4} parent=0 // loop_footer_branch
    %8 = sbr.rel target = $region3
  $region8: #{attention_forward.4} parent=0 // loop_exit
    _

// kernel: attention_forward.3
$region0: #{attention_forward.3}
  #allocation0 [shape = 'u32[]', space=smem, size = 0x4, offset = 0x4, fixed_abs, tag = 'smem constant byte address 0x4 - core index']
  #allocation1 [shape = 'u32[144,128]{1,0:T(1,128)}', space=vmem, size = 0x12000, scoped, tag = 'internal scratch']
  %s0 = inlined_call_operand.vmem [shape: f32[16,256], index: 0, kind: input, shape index: {}]
  %s1 = inlined_call_operand.hbm [shape: f32[256,768], index: 1, kind: input, shape index: {}]
  %s2 = inlined_call_operand.vmem [shape: f32[1,768], index: 2, kind: input, shape index: {}]
  %s3 = inlined_call_operand.vmem [shape: f32[16,768], index: 3, kind: output, shape index: {}]
  %s4 = sld [smem:[#allocation0]]
  $region68: #{attention_forward.3} parent=0
    _
  %s6 = ssub.s32 1, %s4
  %s7 = scalar_select 0, %s6, %s4
  $region1: #{attention_forward.3} parent=0
    #allocation2 [shape = 'u8[786432]{0}', space=vmem, size = 0xc0000, scoped, tag = 'input window, operand 1']
    #allocation3 [shape = 's32[2]{0}', space=sflag, size = 0x8, scoped, tag = 'scoped memory for attention_forward.3']
    #allocation4 [shape = 'u8[49152]{0}', space=vmem, size = 0xc000, scoped, tag = 'output window, operand 0']
    %8 = vsyncpa [#allocation3], 0
    %s9 = scalar_lea.sflag [#allocation3], 1
    %10 = vsyncpa %s9, 0
    loop: start=0, step=1, limit=4
    $region2: #{attention_forward.3} parent=1 // loop_pre_header
      _
    $region3: #{attention_forward.3} parent=1 // loop_header
      %s12 = sphi 0, %s16
      %p13 = scmp.ge.s32.totalorder %s12, 4
      %s19 = sphi 0, %s31
      %s20 = sphi 0, %s27
      %s21 = sphi 0, %s19
      %s22 = sphi 0, %s20
      %s23 = sphi 0, %s21
      %s24 = sphi 0, %s22
      %s34 = sphi 0, %s36
      %s37 = sphi 0, %s34
      %s38 = sphi 0, %s37
      %s54 = sphi 0, %s38
      %s60 = sphi 0, %s62
      %s63 = sphi 0, %s60
      %s64 = sphi 0, %s63
      %s80 = sphi 0, %s64
      %s86 = sphi 0, %s88
      %s89 = sphi 0, %s86
      %s90 = sphi 0, %s89
      %s106 = sphi 0, %s90
      %s114 = sphi 0, %s116
      %s117 = sphi 0, %s114
      %s118 = sphi 0, %s117
      %s134 = sphi 0, %s118
    $region4: #{attention_forward.3} parent=1 // loop_header_branch
      %15 = sbr.rel (%p13) target = $region8
    $region5: #{attention_forward.3} parent=1 // loop_body
      %s17 = ssub.s32 %s12, 1
      %s18 = ssub.s32 %s12, 2
      %s25 = sadd.s32 1, %s20
      %p26 = scmp.ge.s32.totalorder %s25, 2
      %s27 = scalar_select %p26, 0, %s25
      %s28 = sadd.s32 1, %s19
      %s29 = scalar_select %p26, %s28, %s19
      %p30 = scmp.ge.s32.totalorder %s29, 1
      %s31 = scalar_select %p30, 0, %s29
      %s32 = ssub.s32 %s19, %s31
      %p33 = scmp.eq.s32.totalorder %s32, 0
      %s35 = sadd.s32 %s34, 1
      %s36 = scalar_select %p33, %s34, %s35
      %p39 = pneg %p33
      %p40 = scmp.eq.s32.totalorder %s12, 1
      %p41 = por %p39, %p40
      %p42 = scmp.ne.s32.totalorder %s34, %s37
      %p43 = scmp.eq.s32.totalorder %s12, 0
      %p44 = por %p42, %p43
      %p45 = scmp.ne.s32.totalorder %s34, %s37
      %p46 = scmp.eq.s32.totalorder %s17, 1
      %p47 = por %p45, %p46
      %p48 = scmp.ne.s32.totalorder %s37, %s38
      %p49 = scmp.eq.s32.totalorder %s17, 0
      %p50 = por %p48, %p49
      %p51 = scmp.ne.s32.totalorder %s37, %s38
      %p52 = scmp.eq.s32.totalorder %s18, 1
      %p53 = por %p51, %p52
      %p55 = scmp.ne.s32.totalorder %s38, %s54
      %p56 = scmp.eq.s32.totalorder %s18, 0
      %p57 = por %p55, %p56
      %s58 = ssub.s32 %s20, %s27
      %p59 = scmp.eq.s32.totalorder %s58, 0
      %s61 = sadd.s32 %s60, 1
      %s62 = scalar_select %p59, %s60, %s61
      %p65 = pneg %p59
      %p66 = scmp.eq.s32.totalorder %s12, 1
      %p67 = por %p65, %p66
      %p68 = scmp.ne.s32.totalorder %s60, %s63
      %p69 = scmp.eq.s32.totalorder %s12, 0
      %p70 = por %p68, %p69
      %p71 = scmp.ne.s32.totalorder %s60, %s63
      %p72 = scmp.eq.s32.totalorder %s17, 1
      %p73 = por %p71, %p72
      %p74 = scmp.ne.s32.totalorder %s63, %s64
      %p75 = scmp.eq.s32.totalorder %s17, 0
      %p76 = por %p74, %p75
      %p77 = scmp.ne.s32.totalorder %s63, %s64
      %p78 = scmp.eq.s32.totalorder %s18, 1
      %p79 = por %p77, %p78
      %p81 = scmp.ne.s32.totalorder %s64, %s80
      %p82 = scmp.eq.s32.totalorder %s18, 0
      %p83 = por %p81, %p82
      %s84 = ssub.s32 %s20, %s27
      %p85 = scmp.eq.s32.totalorder %s84, 0
      %s87 = sadd.s32 %s86, 1
      %s88 = scalar_select %p85, %s86, %s87
      %p91 = pneg %p85
      %p92 = scmp.eq.s32.totalorder %s12, 1
      %p93 = por %p91, %p92
      %p94 = scmp.ne.s32.totalorder %s86, %s89
      %p95 = scmp.eq.s32.totalorder %s12, 0
      %p96 = por %p94, %p95
      %p97 = scmp.ne.s32.totalorder %s86, %s89
      %p98 = scmp.eq.s32.totalorder %s17, 1
      %p99 = por %p97, %p98
      %p100 = scmp.ne.s32.totalorder %s89, %s90
      %p101 = scmp.eq.s32.totalorder %s17, 0
      %p102 = por %p100, %p101
      %p103 = scmp.ne.s32.totalorder %s89, %s90
      %p104 = scmp.eq.s32.totalorder %s18, 1
      %p105 = por %p103, %p104
      %p107 = scmp.ne.s32.totalorder %s90, %s106
      %p108 = scmp.eq.s32.totalorder %s18, 0
      %p109 = por %p107, %p108
      %s110 = ssub.s32 %s19, %s31
      %s111 = ssub.s32 %s20, %s27
      %s112 = sor.u32 %s110, %s111
      %p113 = scmp.eq.s32.totalorder %s112, 0
      %s115 = sadd.s32 %s114, 1
      %s116 = scalar_select %p113, %s114, %s115
      %p119 = pneg %p113
      %p120 = scmp.eq.s32.totalorder %s12, 1
      %p121 = por %p119, %p120
      %p122 = scmp.ne.s32.totalorder %s114, %s117
      %p123 = scmp.eq.s32.totalorder %s12, 0
      %p124 = por %p122, %p123
      %p125 = scmp.ne.s32.totalorder %s114, %s117
      %p126 = scmp.eq.s32.totalorder %s17, 1
      %p127 = por %p125, %p126
      %p128 = scmp.ne.s32.totalorder %s117, %s118
      %p129 = scmp.eq.s32.totalorder %s17, 0
      %p130 = por %p128, %p129
      %p131 = scmp.ne.s32.totalorder %s117, %s118
      %p132 = scmp.eq.s32.totalorder %s18, 1
      %p133 = por %p131, %p132
      %p135 = scmp.ne.s32.totalorder %s118, %s134
      %p136 = scmp.eq.s32.totalorder %s18, 0
      %p137 = por %p135, %p136
      %p138 = scmp.le.s32.totalorder 1, %s12
      %p139 = scmp.lt.s32.totalorder %s12, 3
      %p140 = pnand %p138, %p139
      %p141 = pneg %p140
      // Predicated region
      $region9: #{attention_forward.3} parent=5 // pred_check
        _
      $region10: #{attention_forward.3} parent=5 // pred_check_branch
        %143 = sbr.rel (%p140) target = $region12
      $region11: #{attention_forward.3} parent=5 // pred_region
        %s144 = ssub.s32 %s12, 1
        // Predicated region
        $region13: #{attention_forward.3} parent=11 // pred_check
          %p145 = pneg %p50
        $region14: #{attention_forward.3} parent=11 // pred_check_branch
          %147 = sbr.rel (%p145) target = $region16
        $region15: #{attention_forward.3} parent=11 // pred_region
          %s148 = smul.u32 2, %s21
          %p149 = scmp.lt.s32.totalorder %s148, 1
          %s150 = scalar_select %p149, %s148, 1
          %s151 = smul.addr %s150, 2
          %s152 = smul.addr %s151, 8
          %s153 = scalar_lea.vmem %s0, %s152
          %s154 = smul.u32 2, %s21
        $region16: #{attention_forward.3} parent=11 // pred_fallthru
          _
      $region12: #{attention_forward.3} parent=5 // pred_fallthru
        _
      %p155 = scmp.lt.s32.totalorder %s12, 2
      // Predicated region
      $region17: #{attention_forward.3} parent=5 // pred_check
        %p156 = pneg %p155
      $region18: #{attention_forward.3} parent=5 // pred_check_branch
        %158 = sbr.rel (%p156) target = $region20
      $region19: #{attention_forward.3} parent=5 // pred_region
        // Predicated region
        $region21: #{attention_forward.3} parent=19 // pred_check
          %p159 = pneg %p70
        $region22: #{attention_forward.3} parent=19 // pred_check_branch
          %161 = sbr.rel (%p159) target = $region24
        $region23: #{attention_forward.3} parent=19 // pred_region
          %s162 = sand.u32 %s60, 1
          %s163 = scalar_lea.sflag [#allocation3], %s162
          %s164 = sand.u32 %s60, 1
          %s165 = smul.addr %s164, 768
          %s166 = scalar_lea.vmem [#allocation2], %s165
          %s167 = smul.u32 3, %s20
          %s169 = ssub.s32 12288, 12288
          %170 = vsyncadd %s163, %s169
          %s171 = smul.addr %s167, 128
          %s172 = scalar_lea.hbm %s1, %s171
          %s173 = sshll.u32 %s166, 4
          %s174 = int_to_ptr.vmem [resolvable:$true] %s173
          %179 = dma.hbm_to_vmem [thread:$0]  %s172, 12288, %s174, %s163, 768, 384, 24
        $region24: #{attention_forward.3} parent=19 // pred_fallthru
          _
        // Predicated region
        $region25: #{attention_forward.3} parent=19 // pred_check
          %p180 = pneg %p96
        $region26: #{attention_forward.3} parent=19 // pred_check_branch
          %182 = sbr.rel (%p180) target = $region28
        $region27: #{attention_forward.3} parent=19 // pred_region
          %s183 = smul.u32 3, %s20
          %p184 = scmp.lt.s32.totalorder %s183, 5
          %s185 = scalar_select %p184, %s183, 5
          %s186 = scalar_lea.vmem %s2, %s185
          %s187 = smul.u32 3, %s20
        $region28: #{attention_forward.3} parent=19 // pred_fallthru
          _
      $region20: #{attention_forward.3} parent=5 // pred_fallthru
        _
      %p188 = scmp.le.s32.totalorder 1, %s12
      %p189 = scmp.lt.s32.totalorder %s12, 3
      %p190 = pnand %p188, %p189
      %p191 = pneg %p190
      // Predicated region
      $region29: #{attention_forward.3} parent=5 // pred_check
        _
      $region30: #{attention_forward.3} parent=5 // pred_check_branch
        %193 = sbr.rel (%p190) target = $region32
      $region31: #{attention_forward.3} parent=5 // pred_region
        %s194 = ssub.s32 %s12, 1
        %s195 = sand.u32 %s63, 1
        %s196 = scalar_lea.sflag [#allocation3], %s195
        %s197 = sand.u32 %s63, 1
        %s198 = smul.addr %s197, 768
        %s199 = scalar_lea.vmem [#allocation2], %s198
        // Predicated region
        $region33: #{attention_forward.3} parent=31 // pred_check
          %p200 = pneg %p76
        $region34: #{attention_forward.3} parent=31 // pred_check_branch
          %202 = sbr.rel (%p200) target = $region36
        $region35: #{attention_forward.3} parent=31 // pred_region
          %203 = dma.done %s196, 12288
        $region36: #{attention_forward.3} parent=31 // pred_fallthru
          _
        %s204 = smul.u32 2, %s21
        %p205 = scmp.lt.s32.totalorder %s204, 1
        %s206 = scalar_select %p205, %s204, 1
        %s207 = smul.addr %s206, 2
        %s208 = smul.addr %s207, 8
        %s209 = scalar_lea.vmem %s0, %s208
        %p210 = pneg %p50
        %p211 = pneg %p47
        %s212 = sand.u32 %s63, 1
        %s213 = scalar_lea.sflag [#allocation3], %s212
        %s214 = sand.u32 %s63, 1
        %s215 = smul.addr %s214, 768
        %s216 = scalar_lea.vmem [#allocation2], %s215
        %p217 = pneg %p76
        %p218 = pneg %p73
        %s219 = smul.u32 3, %s22
        %p220 = scmp.lt.s32.totalorder %s219, 5
        %s221 = scalar_select %p220, %s219, 5
        %s222 = scalar_lea.vmem %s2, %s221
        %p223 = pneg %p102
        %p224 = pneg %p99
        %p225 = pneg %p130
        %p226 = pneg %p127
        %s227 = sand.u32 %s117, 1
        %s228 = sand.u32 %s117, 1
        %s229 = smul.addr %s228, 48
        %s230 = scalar_lea.vmem [#allocation4], %s229
        %s231 = smul.u32 2, %s21
        %p232 = scmp.lt.s32.totalorder %s231, 1
        %s233 = scalar_select %p232, %s231, 1
        %s234 = smul.addr %s233, 2
        %s235 = smul.addr %s234, 8
        %s236 = scalar_lea.vmem %s0, %s235
        %s237 = smul.u32 2, %s21
        %s238 = smul.u32 3, %s22
        %s239 = smul.u32 3, %s22
        %p240 = scmp.lt.s32.totalorder %s239, 5
        %s241 = scalar_select %p240, %s239, 5
        %s242 = scalar_lea.vmem %s2, %s241
        %s243 = smul.u32 3, %s22
        %s244 = smul.u32 2, %s21
        %s245 = smul.u32 3, %s22
        %v247 = vld [vmem:[%s236] sm:$0xff]
        %v248 = vld [vmem:[%s236 + $0x8] sm:$0xff]
        %v249 = vld [vmem:[%s236 + $0x10] sm:$0xff]
        %v250 = vld [vmem:[%s236 + $0x18] sm:$0xff]
        %v251 = vpack.c.bf16 %v249, %v247
        %v252 = vpack.c.bf16 %v250, %v248
        %v253 = vld [vmem:[%s199] sm:$0xff]
        %v254 = vld [vmem:[%s199 + $0x8] sm:$0xff]
        %v255 = vld [vmem:[%s199 + $0x10] sm:$0xff]
        %v256 = vld [vmem:[%s199 + $0x18] sm:$0xff]
        %v257 = vld [vmem:[%s199 + $0x20] sm:$0xff]
        %v258 = vld [vmem:[%s199 + $0x28] sm:$0xff]
        %v259 = vld [vmem:[%s199 + $0x30] sm:$0xff]
        %v260 = vld [vmem:[%s199 + $0x38] sm:$0xff]
        %v261 = vld [vmem:[%s199 + $0x40] sm:$0xff]
        %v262 = vld [vmem:[%s199 + $0x48] sm:$0xff]
        %v263 = vld [vmem:[%s199 + $0x50] sm:$0xff]
        %v264 = vld [vmem:[%s199 + $0x58] sm:$0xff]
        %v265 = vld [vmem:[%s199 + $0x60] sm:$0xff]
        %v266 = vld [vmem:[%s199 + $0x68] sm:$0xff]
        %v267 = vld [vmem:[%s199 + $0x70] sm:$0xff]
        %v268 = vld [vmem:[%s199 + $0x78] sm:$0xff]
        %v269 = vld [vmem:[%s199 + $0x80] sm:$0xff]
        %v270 = vld [vmem:[%s199 + $0x88] sm:$0xff]
        %v271 = vld [vmem:[%s199 + $0x90] sm:$0xff]
        %v272 = vld [vmem:[%s199 + $0x98] sm:$0xff]
        %v273 = vld [vmem:[%s199 + $0xa0] sm:$0xff]
        %v274 = vld [vmem:[%s199 + $0xa8] sm:$0xff]
        %v275 = vld [vmem:[%s199 + $0xb0] sm:$0xff]
        %v276 = vld [vmem:[%s199 + $0xb8] sm:$0xff]
        %v277 = vld [vmem:[%s199 + $0xc0] sm:$0xff]
        %v278 = vld [vmem:[%s199 + $0xc8] sm:$0xff]
        %v279 = vld [vmem:[%s199 + $0xd0] sm:$0xff]
        %v280 = vld [vmem:[%s199 + $0xd8] sm:$0xff]
        %v281 = vld [vmem:[%s199 + $0xe0] sm:$0xff]
        %v282 = vld [vmem:[%s199 + $0xe8] sm:$0xff]
        %v283 = vld [vmem:[%s199 + $0xf0] sm:$0xff]
        %v284 = vld [vmem:[%s199 + $0xf8] sm:$0xff]
        %v285 = vld [vmem:[%s199 + $0x100] sm:$0xff]
        %v286 = vld [vmem:[%s199 + $0x108] sm:$0xff]
        %v287 = vld [vmem:[%s199 + $0x110] sm:$0xff]
        %v288 = vld [vmem:[%s199 + $0x118] sm:$0xff]
        %v289 = vld [vmem:[%s199 + $0x120] sm:$0xff]
        %v290 = vld [vmem:[%s199 + $0x128] sm:$0xff]
        %v291 = vld [vmem:[%s199 + $0x130] sm:$0xff]
        %v292 = vld [vmem:[%s199 + $0x138] sm:$0xff]
        %v293 = vld [vmem:[%s199 + $0x140] sm:$0xff]
        %v294 = vld [vmem:[%s199 + $0x148] sm:$0xff]
        %v295 = vld [vmem:[%s199 + $0x150] sm:$0xff]
        %v296 = vld [vmem:[%s199 + $0x158] sm:$0xff]
        %v297 = vld [vmem:[%s199 + $0x160] sm:$0xff]
        %v298 = vld [vmem:[%s199 + $0x168] sm:$0xff]
        %v299 = vld [vmem:[%s199 + $0x170] sm:$0xff]
        %v300 = vld [vmem:[%s199 + $0x178] sm:$0xff]
        %v301 = vld [vmem:[%s199 + $0x180] sm:$0xff]
        %v302 = vld [vmem:[%s199 + $0x188] sm:$0xff]
        %v303 = vld [vmem:[%s199 + $0x190] sm:$0xff]
        %v304 = vld [vmem:[%s199 + $0x198] sm:$0xff]
        %v305 = vld [vmem:[%s199 + $0x1a0] sm:$0xff]
        %v306 = vld [vmem:[%s199 + $0x1a8] sm:$0xff]
        %v307 = vld [vmem:[%s199 + $0x1b0] sm:$0xff]
        %v308 = vld [vmem:[%s199 + $0x1b8] sm:$0xff]
        %v309 = vld [vmem:[%s199 + $0x1c0] sm:$0xff]
        %v310 = vld [vmem:[%s199 + $0x1c8] sm:$0xff]
        %v311 = vld [vmem:[%s199 + $0x1d0] sm:$0xff]
        %v312 = vld [vmem:[%s199 + $0x1d8] sm:$0xff]
        %v313 = vld [vmem:[%s199 + $0x1e0] sm:$0xff]
        %v314 = vld [vmem:[%s199 + $0x1e8] sm:$0xff]
        %v315 = vld [vmem:[%s199 + $0x1f0] sm:$0xff]
        %v316 = vld [vmem:[%s199 + $0x1f8] sm:$0xff]
        %v317 = vld [vmem:[%s199 + $0x200] sm:$0xff]
        %v318 = vld [vmem:[%s199 + $0x208] sm:$0xff]
        %v319 = vld [vmem:[%s199 + $0x210] sm:$0xff]
        %v320 = vld [vmem:[%s199 + $0x218] sm:$0xff]
        %v321 = vld [vmem:[%s199 + $0x220] sm:$0xff]
        %v322 = vld [vmem:[%s199 + $0x228] sm:$0xff]
        %v323 = vld [vmem:[%s199 + $0x230] sm:$0xff]
        %v324 = vld [vmem:[%s199 + $0x238] sm:$0xff]
        %v325 = vld [vmem:[%s199 + $0x240] sm:$0xff]
        %v326 = vld [vmem:[%s199 + $0x248] sm:$0xff]
        %v327 = vld [vmem:[%s199 + $0x250] sm:$0xff]
        %v328 = vld [vmem:[%s199 + $0x258] sm:$0xff]
        %v329 = vld [vmem:[%s199 + $0x260] sm:$0xff]
        %v330 = vld [vmem:[%s199 + $0x268] sm:$0xff]
        %v331 = vld [vmem:[%s199 + $0x270] sm:$0xff]
        %v332 = vld [vmem:[%s199 + $0x278] sm:$0xff]
        %v333 = vld [vmem:[%s199 + $0x280] sm:$0xff]
        %v334 = vld [vmem:[%s199 + $0x288] sm:$0xff]
        %v335 = vld [vmem:[%s199 + $0x290] sm:$0xff]
        %v336 = vld [vmem:[%s199 + $0x298] sm:$0xff]
        %v337 = vld [vmem:[%s199 + $0x2a0] sm:$0xff]
        %v338 = vld [vmem:[%s199 + $0x2a8] sm:$0xff]
        %v339 = vld [vmem:[%s199 + $0x2b0] sm:$0xff]
        %v340 = vld [vmem:[%s199 + $0x2b8] sm:$0xff]
        %v341 = vld [vmem:[%s199 + $0x2c0] sm:$0xff]
        %v342 = vld [vmem:[%s199 + $0x2c8] sm:$0xff]
        %v343 = vld [vmem:[%s199 + $0x2d0] sm:$0xff]
        %v344 = vld [vmem:[%s199 + $0x2d8] sm:$0xff]
        %v345 = vld [vmem:[%s199 + $0x2e0] sm:$0xff]
        %v346 = vld [vmem:[%s199 + $0x2e8] sm:$0xff]
        %v347 = vld [vmem:[%s199 + $0x2f0] sm:$0xff]
        %v348 = vld [vmem:[%s199 + $0x2f8] sm:$0xff]
        %v349 = vpack.c.bf16 %v256, %v253
        %v350 = vpack.c.bf16 %v257, %v254
        %v351 = vpack.c.bf16 %v258, %v255
        %v352 = vpack.c.bf16 %v262, %v259
        %v353 = vpack.c.bf16 %v263, %v260
        %v354 = vpack.c.bf16 %v264, %v261
        %v355 = vpack.c.bf16 %v268, %v265
        %v356 = vpack.c.bf16 %v269, %v266
        %v357 = vpack.c.bf16 %v270, %v267
        %v358 = vpack.c.bf16 %v274, %v271
        %v359 = vpack.c.bf16 %v275, %v272
        %v360 = vpack.c.bf16 %v276, %v273
        %v361 = vpack.c.bf16 %v280, %v277
        %v362 = vpack.c.bf16 %v281, %v278
        %v363 = vpack.c.bf16 %v282, %v279
        %v364 = vpack.c.bf16 %v286, %v283
        %v365 = vpack.c.bf16 %v287, %v284
        %v366 = vpack.c.bf16 %v288, %v285
        %v367 = vpack.c.bf16 %v292, %v289
        %v368 = vpack.c.bf16 %v293, %v290
        %v369 = vpack.c.bf16 %v294, %v291
        %v370 = vpack.c.bf16 %v298, %v295
        %v371 = vpack.c.bf16 %v299, %v296
        %v372 = vpack.c.bf16 %v300, %v297
        %v373 = vpack.c.bf16 %v304, %v301
        %v374 = vpack.c.bf16 %v305, %v302
        %v375 = vpack.c.bf16 %v306, %v303
        %v376 = vpack.c.bf16 %v310, %v307
        %v377 = vpack.c.bf16 %v311, %v308
        %v378 = vpack.c.bf16 %v312, %v309
        %v379 = vpack.c.bf16 %v316, %v313
        %v380 = vpack.c.bf16 %v317, %v314
        %v381 = vpack.c.bf16 %v318, %v315
        %v382 = vpack.c.bf16 %v322, %v319
        %v383 = vpack.c.bf16 %v323, %v320
        %v384 = vpack.c.bf16 %v324, %v321
        %v385 = vpack.c.bf16 %v328, %v325
        %v386 = vpack.c.bf16 %v329, %v326
        %v387 = vpack.c.bf16 %v330, %v327
        %v388 = vpack.c.bf16 %v334, %v331
        %v389 = vpack.c.bf16 %v335, %v332
        %v390 = vpack.c.bf16 %v336, %v333
        %v391 = vpack.c.bf16 %v340, %v337
        %v392 = vpack.c.bf16 %v341, %v338
        %v393 = vpack.c.bf16 %v342, %v339
        %v394 = vpack.c.bf16 %v346, %v343
        %v395 = vpack.c.bf16 %v347, %v344
        %v396 = vpack.c.bf16 %v348, %v345
        %v397 = vld [vmem:[%s242] sm:$0x7]
        %v399 = vlaneseq
        %v400 = vshrl.u32 %v399, 7
        %v401 = vsub.s32 0, %v400
        %v402 = vrot.slane %v397, %v401
        %v403 = vlaneseq
        %v404 = vshrl.u32 %v403, 7
        %v405 = vsub.s32 1, %v404
        %v406 = vrot.slane %v397, %v405
        %v407 = vlaneseq
        %v408 = vshrl.u32 %v407, 7
        %v409 = vsub.s32 2, %v408
        %v410 = vrot.slane %v397, %v409
        %414 = vmatprep.subr.bf16.mxu0 %v371
        %415 = vmatpush1.bf16.msra.mxu0 %v370
        %416 = vmatprep.subr.bf16.mxu0 %v368
        %417 = vmatpush1.bf16.msra.mxu0 %v367
        %418 = vmatprep.subr.bf16.mxu0 %v365
        %419 = vmatpush1.bf16.msra.mxu0 %v364
        %420 = vmatprep.subr.bf16.mxu0 %v362
        %421 = vmatpush1.bf16.msra.mxu0 %v361
        %422 = vmatprep.subr.bf16.mxu0 %v359
        %423 = vmatpush1.bf16.msra.mxu0 %v358
        %424 = vmatprep.subr.bf16.mxu0 %v356
        %425 = vmatpush1.bf16.msra.mxu0 %v355
        %426 = vmatprep.subr.bf16.mxu0 %v353
        %427 = vmatpush1.bf16.msra.mxu0 %v352
        %428 = vmatprep.subr.bf16.mxu0 %v350
        %429 = vmatpush1.bf16.msra.mxu0 %v349
        %430 = vmatprep.subr.bf16.mxu0 %v395
        %431 = vmatpush2.bf16.msra.mxu0 %v394
        %432 = vmatprep.subr.bf16.mxu0 %v392
        %433 = vmatpush2.bf16.msra.mxu0 %v391
        %434 = vmatprep.subr.bf16.mxu0 %v389
        %435 = vmatpush2.bf16.msra.mxu0 %v388
        %436 = vmatprep.subr.bf16.mxu0 %v386
        %437 = vmatpush2.bf16.msra.mxu0 %v385
        %438 = vmatprep.subr.bf16.mxu0 %v383
        %439 = vmatpush2.bf16.msra.mxu0 %v382
        %440 = vmatprep.subr.bf16.mxu0 %v380
        %441 = vmatpush2.bf16.msra.mxu0 %v379
        %442 = vmatprep.subr.bf16.mxu0 %v377
        %443 = vmatpush2.bf16.msra.mxu0 %v376
        %444 = vmatprep.subr.bf16.mxu0 %v374
        %445 = vmatpush2.bf16.msra.mxu0 %v373
        %446 = vmatprep.mubr.bf16.mxu0 %v252
        %447 = vmatmul.mubr.bf16.gmra.mxu0 %v251
        %v448 = vpop.f32.mrf.mxu0
        %v449 = vadd.f32 %v402, %v448
        %v450 = vpop.f32.mrf.mxu0
        %v451 = vadd.f32 %v406, %v450
        %v452 = vpop.f32.mrf.mxu0
        %v453 = vadd.f32 %v402, %v452
        %v454 = vpop.f32.mrf.mxu0
        %v455 = vadd.f32 %v406, %v454
        %456 = vdwg.mxu0
        %457 = vmatprep.subr.bf16.mxu0 0
        %458 = vmatpush1.bf16.msra.mxu0 %v372
        %459 = vmatprep.subr.bf16.mxu0 0
        %460 = vmatpush1.bf16.msra.mxu0 %v369
        %461 = vmatprep.subr.bf16.mxu0 0
        %462 = vmatpush1.bf16.msra.mxu0 %v366
        %463 = vmatprep.subr.bf16.mxu0 0
        %464 = vmatpush1.bf16.msra.mxu0 %v363
        %465 = vmatprep.subr.bf16.mxu0 0
        %466 = vmatpush1.bf16.msra.mxu0 %v360
        %467 = vmatprep.subr.bf16.mxu0 0
        %468 = vmatpush1.bf16.msra.mxu0 %v357
        %469 = vmatprep.subr.bf16.mxu0 0
        %470 = vmatpush1.bf16.msra.mxu0 %v354
        %471 = vmatprep.subr.bf16.mxu0 0
        %472 = vmatpush1.bf16.msra.mxu0 %v351
        %473 = vmatprep.subr.bf16.mxu0 0
        %474 = vmatpush2.bf16.msra.mxu0 %v396
        %475 = vmatprep.subr.bf16.mxu0 0
        %476 = vmatpush2.bf16.msra.mxu0 %v393
        %477 = vmatprep.subr.bf16.mxu0 0
        %478 = vmatpush2.bf16.msra.mxu0 %v390
        %479 = vmatprep.subr.bf16.mxu0 0
        %480 = vmatpush2.bf16.msra.mxu0 %v387
        %481 = vmatprep.subr.bf16.mxu0 0
        %482 = vmatpush2.bf16.msra.mxu0 %v384
        %483 = vmatprep.subr.bf16.mxu0 0
        %484 = vmatpush2.bf16.msra.mxu0 %v381
        %485 = vmatprep.subr.bf16.mxu0 0
        %486 = vmatpush2.bf16.msra.mxu0 %v378
        %487 = vmatprep.subr.bf16.mxu0 0
        %488 = vmatpush2.bf16.msra.mxu0 %v375
        %489 = vmatprep.mubr.bf16.mxu0 %v252
        %490 = vmatmul.mubr.bf16.gmra.mxu0 %v251
        %v491 = vpop.f32.mrf.mxu0
        %v492 = vadd.f32 %v410, %v491
        %v493 = vpop.f32.mrf.mxu0
        %v494 = vpop.f32.mrf.mxu0
        %v495 = vadd.f32 %v410, %v494
        %v496 = vpop.f32.mrf.mxu0
        %497 = vdwg.mxu0
        %498 = vst [vmem:[%s230] sm:$0xff] %v449
        %499 = vst [vmem:[%s230 + $0x8] sm:$0xff] %v451
        %500 = vst [vmem:[%s230 + $0x10] sm:$0xff] %v492
        %501 = vst [vmem:[%s230 + $0x18] sm:$0xff] %v453
        %502 = vst [vmem:[%s230 + $0x20] sm:$0xff] %v455
        %503 = vst [vmem:[%s230 + $0x28] sm:$0xff] %v495
        %s504 = sand.u32 %s117, 1
        %s505 = sand.u32 %s117, 1
        %s506 = smul.addr %s505, 48
        %s507 = scalar_lea.vmem [#allocation4], %s506
        // Predicated region
        $region37: #{attention_forward.3} parent=31 // pred_check
          %p508 = pneg %p127
        $region38: #{attention_forward.3} parent=31 // pred_check_branch
          %510 = sbr.rel (%p508) target = $region40
        $region39: #{attention_forward.3} parent=31 // pred_region
          %s511 = smul.u32 2, %s21
          %s512 = smul.u32 3, %s22
          %s513 = smul.addr %s511, 6
          %s514 = sadd.s32 %s512, %s513
          %s515 = smul.addr %s514, 8
          %s516 = scalar_lea.vmem %s3, %s515
          // Predicated region
          $region41: #{attention_forward.3} parent=39 // pred_check
            _
          $region42: #{attention_forward.3} parent=39 // pred_check_branch
            %518 = sbr.rel (0) target = $region44
          $region43: #{attention_forward.3} parent=39 // pred_region
            // Predicated region
            $region45: #{attention_forward.3} parent=43 // pred_check
              _
            $region46: #{attention_forward.3} parent=43 // pred_check_branch
              %520 = sbr.rel (0) target = $region48
            $region47: #{attention_forward.3} parent=43 // pred_region
              loop: start=0, step=1, limit=1
              $region49: #{attention_forward.3} parent=47 // loop_pre_header
                _
              $region50: #{attention_forward.3} parent=47 // loop_header
                %s522 = sphi 0, %s526
                %p523 = scmp.ge.s32.totalorder %s522, 1
                %s527 = sphi %s507, %s507
                %s528 = sphi %s516, %s516
              $region51: #{attention_forward.3} parent=47 // loop_header_branch
                %525 = sbr.rel (%p523) target = $region55
              $region52: #{attention_forward.3} parent=47 // loop_body
                %v529 = vld [vmem:[%s527] sm:$0xff]
                %530 = vst [vmem:[%s528] sm:$0xff] %v529
                %v531 = vld [vmem:[%s527 + $0x8] sm:$0xff]
                %532 = vst [vmem:[%s528 + $0x8] sm:$0xff] %v531
                %v533 = vld [vmem:[%s527 + $0x10] sm:$0xff]
                %534 = vst [vmem:[%s528 + $0x10] sm:$0xff] %v533
                %v535 = vld [vmem:[%s527 + $0x18] sm:$0xff]
                %536 = vst [vmem:[%s528 + $0x30] sm:$0xff] %v535
                %v537 = vld [vmem:[%s527 + $0x20] sm:$0xff]
                %538 = vst [vmem:[%s528 + $0x38] sm:$0xff] %v537
                %v539 = vld [vmem:[%s527 + $0x28] sm:$0xff]
                %540 = vst [vmem:[%s528 + $0x40] sm:$0xff] %v539
              $region53: #{attention_forward.3} parent=47 // loop_footer
                %s526 = sadd.s32 1, %s522
              $region54: #{attention_forward.3} parent=47 // loop_footer_branch
                %521 = sbr.rel target = $region50
              $region55: #{attention_forward.3} parent=47 // loop_exit
                _
            $region48: #{attention_forward.3} parent=43 // pred_fallthru
              _
            // Predicated region
            $region56: #{attention_forward.3} parent=43 // pred_check
              _
            $region57: #{attention_forward.3} parent=43 // pred_check_branch
              %542 = sbr.rel target = $region59
            $region58: #{attention_forward.3} parent=43 // pred_region
              _
            $region59: #{attention_forward.3} parent=43 // pred_fallthru
              _
          $region44: #{attention_forward.3} parent=39 // pred_fallthru
            _
          %543 = vnop
        $region40: #{attention_forward.3} parent=31 // pred_fallthru
          _
      $region32: #{attention_forward.3} parent=5 // pred_fallthru
        _
      %p544 = scmp.le.s32.totalorder 2, %s12
      // Predicated region
      $region60: #{attention_forward.3} parent=5 // pred_check
        %p545 = pneg %p544
      $region61: #{attention_forward.3} parent=5 // pred_check_branch
        %547 = sbr.rel (%p545) target = $region63
      $region62: #{attention_forward.3} parent=5 // pred_region
        %s548 = ssub.s32 %s12, 2
        // Predicated region
        $region64: #{attention_forward.3} parent=62 // pred_check
          %p549 = pneg %p133
        $region65: #{attention_forward.3} parent=62 // pred_check_branch
          %551 = sbr.rel (%p549) target = $region67
        $region66: #{attention_forward.3} parent=62 // pred_region
          %s552 = sand.u32 %s118, 1
          %s553 = sand.u32 %s118, 1
          %s554 = smul.addr %s553, 48
          %s555 = scalar_lea.vmem [#allocation4], %s554
        $region67: #{attention_forward.3} parent=62 // pred_fallthru
          _
      $region63: #{attention_forward.3} parent=5 // pred_fallthru
        _
    $region6: #{attention_forward.3} parent=1 // loop_footer
      %s16 = sadd.s32 1, %s12
    $region7: #{attention_forward.3} parent=1 // loop_footer_branch
      %11 = sbr.rel target = $region3
    $region8: #{attention_forward.3} parent=1 // loop_exit
      _
    %556 = vsyncpa [#allocation3], 1
    %s557 = scalar_lea.sflag [#allocation3], 1
    %558 = vsyncpa %s557, 1

</llo_original>
